<compile_context>
chip_gen: v7x
topology: tpu7x:2x2x1
jax: 0.10.0
libtpu: 0.0.40
codegen_flags: <defaults>
</compile_context>

<pallas_src>
import functools
import math

import jax
import jax.numpy as jnp
from jax import lax
from jax.experimental import pallas as pl
from jax.experimental.pallas import tpu as pltpu


def _round_up(a, b):
    return -(-a // b) * b


def _cdiv(a, b):
    return -(-a // b)


def _fc_margin_kernel(xn_ref, gt_ref, label_ref, w_ref, o_ref, *,
                      s, m, t, cos_m, sin_m, easy_margin, fc_type, block_n):
    """Per-tile: normalize W tile -> cos matmul (bf16 MXU, f32 acc) -> margin
    -> ground-truth column scatter -> *s -> store."""
    j = pl.program_id(1)                 # class-tile index (inner grid axis)
    eps = 1e-12                          # F.normalize eps on the squared norm

    # ---- normalize this tile of class-weight rows ---------------------------
    # f32-accumulated sum of squares; the scale multiply stays in the weight's
    # native dtype (bf16 on v6e/v7x) to avoid materializing an f32 tile copy.
    wb = w_ref[...]                                                     # (bn, D)
    wf = wb.astype(jnp.float32)
    rinv_w = lax.rsqrt(jnp.maximum(jnp.sum(wf * wf, axis=1, keepdims=True), eps))
    wn_bf = (wb * rinv_w.astype(wb.dtype)).astype(jnp.bfloat16)

    # ---- cos_theta tile: "NT" matmul, bf16 operands, f32 accumulation -------
    cos = lax.dot_general(xn_ref[...], wn_bf, (((1,), (1,)), ((), ())),
                          preferred_element_type=jnp.float32)           # (bm, bn)

    gt = gt_ref[...]                                                    # (bm, 1)

    # ---- margin logic (static Python branch on fc_type) ---------------------
    if fc_type == 'Arc':
        sin_theta = jnp.sqrt(jnp.maximum(1.0 - gt * gt, 0.0))
        cos_theta_m = gt * cos_m - sin_theta * sin_m
        cos_mod = cos
        final_gt = jnp.where(gt > 0, cos_theta_m, gt) if easy_margin else cos_theta_m
    elif fc_type == 'MV-AM':
        hard = cos > (gt - m)
        cos_mod = jnp.where(hard, (t + 1.0) * cos + t, cos)
        final_gt = jnp.where(gt > 0, gt - m, gt) if easy_margin else (gt - m)
    elif fc_type == 'MV-Arc':
        sin_theta = jnp.sqrt(jnp.maximum(1.0 - gt * gt, 0.0))
        cos_theta_m = gt * cos_m - sin_theta * sin_m
        hard = cos > cos_theta_m
        cos_mod = jnp.where(hard, (t + 1.0) * cos + t, cos)
        final_gt = jnp.where(gt > 0, cos_theta_m, gt) if easy_margin else cos_theta_m
    else:
        raise ValueError(f"unknown fc_type: {fc_type}")

    # ---- scatter_(1, label, final_gt) fused into the store, then *s ---------
    col = lax.broadcasted_iota(jnp.int32, cos.shape, 1) + j * block_n
    is_gt = col == label_ref[...]                                       # (bm,1) bcast
    o_ref[...] = (jnp.where(is_gt, final_gt, cos_mod) * s).astype(o_ref.dtype)


def fc_forward(x, label, weight, *, s=32.0, m=0.5, t=0.2,
               easy_margin=False, fc_type='MV-AM',
               block_n=None, block_m=256, out_dtype=jnp.float32):
    """Pallas implementation of FC.forward (margin-softmax logits).

    x:      (B, in_feature)   float32 / bfloat16
    label:  (B,)              int
    weight: (out_feature, in_feature)  -- bf16 recommended (halves HBM traffic)
    returns (B, out_feature)  out_dtype logits (already scaled by s)
    """
    B, D = x.shape
    O, D2 = weight.shape
    assert D == D2, (D, D2)
    eps = 1e-12

    label = label.astype(jnp.int32)

    # ---- hoisted per-row work (B x D, done once, not once per class tile) ---
    xf = x.astype(jnp.float32)
    xn = xf * lax.rsqrt(jnp.maximum(jnp.sum(xf * xf, axis=1, keepdims=True), eps))
    xn_bf = xn.astype(jnp.bfloat16)

    w_gt = jnp.take(weight, label, axis=0).astype(jnp.float32)          # (B, D)
    wgt_n = w_gt * lax.rsqrt(jnp.maximum(jnp.sum(w_gt * w_gt, axis=1,
                                                 keepdims=True), eps))
    gt = jnp.sum(xn * wgt_n, axis=1, keepdims=True).astype(jnp.float32)  # (B, 1)

    # ---- tile sizing ---------------------------------------------------------
    w_itemsize = jnp.dtype(weight.dtype).itemsize
    bm = min(int(block_m), _round_up(B, 8))
    bm = _round_up(bm, 8)
    Bp = _round_up(B, bm)

    O128 = _round_up(O, 128)
    target_tile_bytes = 2 << 20          # aim for multi-MB W DMAs per grid step
    bn = _round_up(max(128, _cdiv(target_tile_bytes, D * w_itemsize)), 128)
    bn = min(bn, 4096, O128)
    if block_n is not None:
        bn = min(bn, max(128, _round_up(int(block_n), 128)))

    def _footprint(bn_):
        # generous accounting: W double-buffer + f32/bf16 normalize temps +
        # out double-buffer + cos f32 + resident xn/gt/label double-buffers.
        return (2 * bn_ * D * w_itemsize
                + bn_ * D * 4 + bn_ * D * 2
                + 2 * bm * bn_ * jnp.dtype(out_dtype).itemsize
                + bm * bn_ * 4
                + 2 * bm * D * 2 + 4 * bm * 8)

    vmem_budget = 24 << 20               # safe on v7x (64 MiB physical)
    while _footprint(bn) > vmem_budget and bn > 128:
        bn = max(128, (bn // 2) // 128 * 128)

    # v7x megacore: prefer >= 2 total grid steps, but only if the halved
    # W tile stays a reasonably sized DMA (>= 256 KiB).
    if (Bp // bm) * _cdiv(O128, bn) < 2:
        half = max(128, (bn // 2) // 128 * 128)
        if half < bn and half * D * w_itemsize >= (256 << 10):
            bn = half
    Op = _round_up(O, bn)

    vmem_limit = int(min(48 << 20, max(32 << 20,
                                       _footprint(bn) * 7 // 4 + (4 << 20))))

    # ---- padding to tile multiples ------------------------------------------
    xp = xn_bf if Bp == B else jnp.pad(xn_bf, ((0, Bp - B), (0, 0)))
    gtp = gt if Bp == B else jnp.pad(gt, ((0, Bp - B), (0, 0)))
    labp = (label if Bp == B else jnp.pad(label, (0, Bp - B))).reshape(Bp, 1)
    wp = weight if Op == O else jnp.pad(weight, ((0, Op - O), (0, 0)))

    kern = functools.partial(
        _fc_margin_kernel, s=float(s), m=float(m), t=float(t),
        cos_m=math.cos(m), sin_m=math.sin(m),
        easy_margin=easy_margin, fc_type=fc_type, block_n=bn)

    out = pl.pallas_call(
        kern,
        out_shape=jax.ShapeDtypeStruct((Bp, Op), out_dtype),
        grid=(Bp // bm, Op // bn),
        in_specs=[
            pl.BlockSpec((bm, D), lambda i, j: (i, 0)),     # normalized x (bf16)
            pl.BlockSpec((bm, 1), lambda i, j: (i, 0)),     # ground-truth cosine
            pl.BlockSpec((bm, 1), lambda i, j: (i, 0)),     # labels
            pl.BlockSpec((bn, D), lambda i, j: (j, 0)),     # class-weight tile
        ],
        out_specs=pl.BlockSpec((bm, bn), lambda i, j: (i, j)),
        compiler_params=pltpu.CompilerParams(
            dimension_semantics=("parallel", "parallel"),
            vmem_limit_bytes=vmem_limit),
    )(xp, gtp, labp, wp)

    return out[:B, :O]


# --------------------------- pure-JAX reference ------------------------------

def _fc_reference(x, label, weight, *, s=32.0, m=0.5, t=0.2,
                  easy_margin=False, fc_type='MV-AM'):
    xn = x / jnp.maximum(jnp.linalg.norm(x, axis=1, keepdims=True), 1e-12)
    wn = weight / jnp.maximum(jnp.linalg.norm(weight, axis=1, keepdims=True), 1e-12)
    cos = xn @ wn.T
    b = x.shape[0]
    gt = cos[jnp.arange(b), label][:, None]
    if fc_type == 'Arc':
        sin_theta = jnp.sqrt(jnp.maximum(1.0 - gt * gt, 0.0))
        cos_theta_m = gt * math.cos(m) - sin_theta * math.sin(m)
        cos_mod = cos
        final_gt = jnp.where(gt > 0, cos_theta_m, gt) if easy_margin else cos_theta_m
    elif fc_type == 'MV-AM':
        cos_mod = jnp.where(cos > gt - m, (t + 1.0) * cos + t, cos)
        final_gt = jnp.where(gt > 0, gt - m, gt) if easy_margin else (gt - m)
    elif fc_type == 'MV-Arc':
        sin_theta = jnp.sqrt(jnp.maximum(1.0 - gt * gt, 0.0))
        cos_theta_m = gt * math.cos(m) - sin_theta * math.sin(m)
        cos_mod = jnp.where(cos > cos_theta_m, (t + 1.0) * cos + t, cos)
        final_gt = jnp.where(gt > 0, cos_theta_m, gt) if easy_margin else cos_theta_m
    else:
        raise ValueError(fc_type)
    one_hot = jax.nn.one_hot(label, cos.shape[1], dtype=bool)
    return jnp.where(one_hot, final_gt, cos_mod) * s


# ---------------------------------- main -------------------------------------

if __name__ == "__main__":
    key = jax.random.PRNGKey(0)
    k1, k2, k3 = jax.random.split(key, 3)

    batch, in_feature, out_feature = 8, 128, 2048
    x = jax.random.normal(k1, (batch, in_feature), jnp.float32)
    label = jax.random.randint(k2, (batch,), 0, out_feature, jnp.int32)

    # xavier-uniform init of the class-weight matrix; stored in bf16 so the
    # steady-state forward only moves half the bytes for the dominant W read.
    limit = math.sqrt(6.0 / (in_feature + out_feature))
    w = jax.random.uniform(k3, (out_feature, in_feature), jnp.float32, -limit, limit)
    w_bf16 = w.astype(jnp.bfloat16)

    fwd = jax.jit(fc_forward)
    out = jax.block_until_ready(fwd(x, label, w_bf16))

    assert out.shape == (batch, out_feature), out.shape
    assert bool(jnp.all(jnp.isfinite(out)))

    # Loose reference check (f32 reference on the same bf16-rounded weights).
    # Tolerate the (vanishingly rare) elements that flip the hard-example branch
    # exactly at the threshold because of the bf16 MXU operand rounding.
    ref = _fc_reference(x, label, w_bf16.astype(jnp.float32))
    diff = jnp.abs(out - ref)
    frac_bad = float(jnp.mean((diff > 0.05 * 32.0).astype(jnp.float32)))
    assert frac_bad < 5e-3, frac_bad
    rows = jnp.arange(batch)
    assert bool(jnp.allclose(out[rows, label], ref[rows, label], atol=0.32)), \
        (out[rows, label], ref[rows, label])

    print("KERNEL_OK")
</pallas_src>

<mosaic_0001>
module attributes {stable_mosaic.version = 11 : i64} {
  func.func @_fc_margin_kernel(%arg0: i32, %arg1: i32, %arg2: memref<8x128xbf16, #tpu.memory_space<vmem>>, %arg3: memref<8x1xf32, #tpu.memory_space<vmem>>, %arg4: memref<8x1xi32, #tpu.memory_space<vmem>>, %arg5: memref<1024x128xbf16, #tpu.memory_space<vmem>>, %arg6: memref<8x1024xf32, #tpu.memory_space<vmem>>) attributes {dimension_semantics = [#tpu.dimension_semantics<parallel>, #tpu.dimension_semantics<parallel>], iteration_bounds = array<i64: 1, 2>, scalar_prefetch = 0 : i64, scratch_operands = 0 : i64, tpu.core_type = #tpu.core_type<tc>, window_params = [{transform_indices = @transform_0, window_bounds = array<i64: 8, 128>}, {transform_indices = @transform_1, window_bounds = array<i64: 8, 1>}, {transform_indices = @transform_2, window_bounds = array<i64: 8, 1>}, {transform_indices = @transform_3, window_bounds = array<i64: 1024, 128>}, {transform_indices = @transform_4, window_bounds = array<i64: 8, 1024>}]} {
    %c0 = arith.constant 0 : index
    %c0_0 = arith.constant 0 : index
    %0 = vector.load %arg5[%c0, %c0_0] : memref<1024x128xbf16, #tpu.memory_space<vmem>>, vector<1024x128xbf16>
    %1 = arith.extf %0 : vector<1024x128xbf16> to vector<1024x128xf32>
    %2 = arith.mulf %1, %1 : vector<1024x128xf32>
    %cst = arith.constant dense<0.000000e+00> : vector<1024xf32>
    %3 = vector.multi_reduction <add>, %2, %cst [1] : vector<1024x128xf32> to vector<1024xf32>
    %4 = vector.shape_cast %3 : vector<1024xf32> to vector<1024x1xf32>
    %cst_1 = arith.constant 9.99999996E-13 : f32
    %5 = vector.broadcast %cst_1 : f32 to vector<1024x1xf32>
    %6 = arith.maximumf %4, %5 : vector<1024x1xf32>
    %7 = math.rsqrt %6 : vector<1024x1xf32>
    %8 = arith.truncf %7 : vector<1024x1xf32> to vector<1024x1xbf16>
    %9 = vector.broadcast %8 : vector<1024x1xbf16> to vector<1024x128xbf16>
    %10 = arith.mulf %0, %9 : vector<1024x128xbf16>
    %c0_2 = arith.constant 0 : index
    %c0_3 = arith.constant 0 : index
    %11 = vector.load %arg2[%c0_2, %c0_3] : memref<8x128xbf16, #tpu.memory_space<vmem>>, vector<8x128xbf16>
    %cst_4 = arith.constant dense<0.000000e+00> : vector<8x1024xf32>
    %12 = tpu.matmul %11, %10, %cst_4 {dimension_numbers = #tpu.dot_dimension_numbers<[1], [1], [0], [0], [0, 0, 1, 0], [], []>} : vector<8x128xbf16>, vector<1024x128xbf16>, vector<8x1024xf32> -> vector<8x1024xf32>
    %c0_5 = arith.constant 0 : index
    %c0_6 = arith.constant 0 : index
    %13 = vector.load %arg3[%c0_5, %c0_6] : memref<8x1xf32, #tpu.memory_space<vmem>>, vector<8x1xf32>
    %cst_7 = arith.constant 5.000000e-01 : f32
    %14 = vector.broadcast %cst_7 : f32 to vector<8x1xf32>
    %15 = arith.subf %13, %14 : vector<8x1xf32>
    %16 = vector.broadcast %15 : vector<8x1xf32> to vector<8x1024xf32>
    %17 = arith.cmpf ogt, %12, %16 : vector<8x1024xf32>
    %cst_8 = arith.constant 1.200000e+00 : f32
    %18 = vector.broadcast %cst_8 : f32 to vector<8x1024xf32>
    %19 = arith.mulf %18, %12 : vector<8x1024xf32>
    %cst_9 = arith.constant 2.000000e-01 : f32
    %20 = vector.broadcast %cst_9 : f32 to vector<8x1024xf32>
    %21 = arith.addf %19, %20 : vector<8x1024xf32>
    %22 = arith.select %17, %21, %12 : vector<8x1024xi1>, vector<8x1024xf32>
    %cst_10 = arith.constant 5.000000e-01 : f32
    %23 = vector.broadcast %cst_10 : f32 to vector<8x1xf32>
    %24 = arith.subf %13, %23 : vector<8x1xf32>
    %25 = tpu.iota {dimensions = array<i32: 1>} : vector<8x1024xi32>
    %c1024_i32 = arith.constant 1024 : i32
    %26 = arith.muli %arg1, %c1024_i32 : i32
    %27 = vector.broadcast %26 : i32 to vector<8x1024xi32>
    %28 = arith.addi %25, %27 : vector<8x1024xi32>
    %c0_11 = arith.constant 0 : index
    %c0_12 = arith.constant 0 : index
    %29 = vector.load %arg4[%c0_11, %c0_12] : memref<8x1xi32, #tpu.memory_space<vmem>>, vector<8x1xi32>
    %30 = vector.broadcast %29 : vector<8x1xi32> to vector<8x1024xi32>
    %31 = arith.cmpi eq, %28, %30 : vector<8x1024xi32>
    %32 = vector.shape_cast %24 : vector<8x1xf32> to vector<8x1xf32>
    %33 = vector.broadcast %32 : vector<8x1xf32> to vector<8x1024xf32>
    %34 = arith.select %31, %33, %22 : vector<8x1024xi1>, vector<8x1024xf32>
    %cst_13 = arith.constant 3.200000e+01 : f32
    %35 = vector.broadcast %cst_13 : f32 to vector<8x1024xf32>
    %36 = arith.mulf %34, %35 : vector<8x1024xf32>
    %c0_14 = arith.constant 0 : index
    %c0_15 = arith.constant 0 : index
    %37 = vector.load %arg6[%c0_14, %c0_15] : memref<8x1024xf32, #tpu.memory_space<vmem>>, vector<8x1024xf32>
    tpu.vector_store %arg6[%c0_14, %c0_15], %36 {strides = array<i32>} : memref<8x1024xf32, #tpu.memory_space<vmem>>, vector<8x1024xf32>,
    return
  }
  func.func @transform_0(%arg0: i32, %arg1: i32) -> (i32, i32) {
    %c0_i32 = arith.constant 0 : i32
    %c0_i32_0 = arith.constant 0 : i32
    return %arg0, %c0_i32 : i32, i32
  }
  func.func @transform_1(%arg0: i32, %arg1: i32) -> (i32, i32) {
    %c0_i32 = arith.constant 0 : i32
    %c0_i32_0 = arith.constant 0 : i32
    return %arg0, %c0_i32 : i32, i32
  }
  func.func @transform_2(%arg0: i32, %arg1: i32) -> (i32, i32) {
    %c0_i32 = arith.constant 0 : i32
    %c0_i32_0 = arith.constant 0 : i32
    return %arg0, %c0_i32 : i32, i32
  }
  func.func @transform_3(%arg0: i32, %arg1: i32) -> (i32, i32) {
    %c0_i32 = arith.constant 0 : i32
    %c0_i32_0 = arith.constant 0 : i32
    return %arg1, %c0_i32 : i32, i32
  }
  func.func @transform_4(%arg0: i32, %arg1: i32) -> (i32, i32) {
    %c0_i32 = arith.constant 0 : i32
    return %arg0, %arg1 : i32, i32
  }
}

</mosaic_0001>

<llo_original>
// kernel: fc_forward.1
$region0: #{fc_forward.1}
  #allocation0 [shape = 'u32[]', space=smem, size = 0x4, offset = 0x4, fixed_abs, tag = 'smem constant byte address 0x4 - core index']
  #allocation1 [shape = 'u32[144,128]{1,0:T(1,128)}', space=vmem, size = 0x12000, scoped, tag = 'internal scratch']
  %s0 = inlined_call_operand.vmem [shape: bf16[8,128], index: 0, kind: input, shape index: {}]
  %s1 = inlined_call_operand.vmem [shape: f32[8,1], index: 1, kind: input, shape index: {}]
  %s2 = inlined_call_operand.vmem [shape: s32[8,1], index: 2, kind: input, shape index: {}]
  %s3 = inlined_call_operand.hbm [shape: bf16[2048,128], index: 3, kind: input, shape index: {}]
  %s4 = inlined_call_operand.hbm [shape: f32[8,2048], index: 4, kind: output, shape index: {}]
  %s5 = sld [smem:[#allocation0]]
  $region53: #{fc_forward.1} parent=0
    _
  %s7 = ssub.s32 1, %s5
  %s8 = scalar_select 0, %s7, %s5
  $region1: #{fc_forward.1} parent=0
    #allocation2 [shape = 'u8[524288]{0}', space=vmem, size = 0x80000, scoped, tag = 'input window, operand 3']
    #allocation3 [shape = 's32[2]{0}', space=sflag, size = 0x8, scoped, tag = 'scoped memory for fc_forward.1']
    #allocation4 [shape = 's32[2]{0}', space=sflag, size = 0x8, scoped, tag = 'scoped memory for fc_forward.1']
    #allocation5 [shape = 'u8[65536]{0}', space=vmem, size = 0x10000, scoped, tag = 'output window, operand 0']
    %9 = vsyncpa [#allocation3], 0
    %s10 = scalar_lea.sflag [#allocation3], 1
    %11 = vsyncpa %s10, 0
    %12 = vsyncpa [#allocation4], 0
    %s13 = scalar_lea.sflag [#allocation4], 1
    %14 = vsyncpa %s13, 0
    loop: start=0, step=1, limit=4
    $region2: #{fc_forward.1} parent=1 // loop_pre_header
      _
    $region3: #{fc_forward.1} parent=1 // loop_header
      %s16 = sphi 0, %s20
      %p17 = scmp.ge.s32.totalorder %s16, 4
      %s23 = sphi 0, %s35
      %s24 = sphi 0, %s31
      %s25 = sphi 0, %s23
      %s26 = sphi 0, %s24
      %s27 = sphi 0, %s25
      %s28 = sphi 0, %s26
      %s38 = sphi 0, %s40
      %s41 = sphi 0, %s38
      %s42 = sphi 0, %s41
      %s58 = sphi 0, %s42
      %s64 = sphi 0, %s66
      %s67 = sphi 0, %s64
      %s68 = sphi 0, %s67
      %s84 = sphi 0, %s68
      %s90 = sphi 0, %s92
      %s93 = sphi 0, %s90
      %s94 = sphi 0, %s93
      %s110 = sphi 0, %s94
      %s116 = sphi 0, %s118
      %s119 = sphi 0, %s116
      %s120 = sphi 0, %s119
      %s136 = sphi 0, %s120
      %s144 = sphi 0, %s146
      %s147 = sphi 0, %s144
      %s148 = sphi 0, %s147
      %s164 = sphi 0, %s148
    $region4: #{fc_forward.1} parent=1 // loop_header_branch
      %19 = sbr.rel (%p17) target = $region8
    $region5: #{fc_forward.1} parent=1 // loop_body
      %s21 = ssub.s32 %s16, 1
      %s22 = ssub.s32 %s16, 2
      %s29 = sadd.s32 1, %s24
      %p30 = scmp.ge.s32.totalorder %s29, 2
      %s31 = scalar_select %p30, 0, %s29
      %s32 = sadd.s32 1, %s23
      %s33 = scalar_select %p30, %s32, %s23
      %p34 = scmp.ge.s32.totalorder %s33, 1
      %s35 = scalar_select %p34, 0, %s33
      %s36 = ssub.s32 %s23, %s35
      %p37 = scmp.eq.s32.totalorder %s36, 0
      %s39 = sadd.s32 %s38, 1
      %s40 = scalar_select %p37, %s38, %s39
      %p43 = pneg %p37
      %p44 = scmp.eq.s32.totalorder %s16, 1
      %p45 = por %p43, %p44
      %p46 = scmp.ne.s32.totalorder %s38, %s41
      %p47 = scmp.eq.s32.totalorder %s16, 0
      %p48 = por %p46, %p47
      %p49 = scmp.ne.s32.totalorder %s38, %s41
      %p50 = scmp.eq.s32.totalorder %s21, 1
      %p51 = por %p49, %p50
      %p52 = scmp.ne.s32.totalorder %s41, %s42
      %p53 = scmp.eq.s32.totalorder %s21, 0
      %p54 = por %p52, %p53
      %p55 = scmp.ne.s32.totalorder %s41, %s42
      %p56 = scmp.eq.s32.totalorder %s22, 1
      %p57 = por %p55, %p56
      %p59 = scmp.ne.s32.totalorder %s42, %s58
      %p60 = scmp.eq.s32.totalorder %s22, 0
      %p61 = por %p59, %p60
      %s62 = ssub.s32 %s23, %s35
      %p63 = scmp.eq.s32.totalorder %s62, 0
      %s65 = sadd.s32 %s64, 1
      %s66 = scalar_select %p63, %s64, %s65
      %p69 = pneg %p63
      %p70 = scmp.eq.s32.totalorder %s16, 1
      %p71 = por %p69, %p70
      %p72 = scmp.ne.s32.totalorder %s64, %s67
      %p73 = scmp.eq.s32.totalorder %s16, 0
      %p74 = por %p72, %p73
      %p75 = scmp.ne.s32.totalorder %s64, %s67
      %p76 = scmp.eq.s32.totalorder %s21, 1
      %p77 = por %p75, %p76
      %p78 = scmp.ne.s32.totalorder %s67, %s68
      %p79 = scmp.eq.s32.totalorder %s21, 0
      %p80 = por %p78, %p79
      %p81 = scmp.ne.s32.totalorder %s67, %s68
      %p82 = scmp.eq.s32.totalorder %s22, 1
      %p83 = por %p81, %p82
      %p85 = scmp.ne.s32.totalorder %s68, %s84
      %p86 = scmp.eq.s32.totalorder %s22, 0
      %p87 = por %p85, %p86
      %s88 = ssub.s32 %s23, %s35
      %p89 = scmp.eq.s32.totalorder %s88, 0
      %s91 = sadd.s32 %s90, 1
      %s92 = scalar_select %p89, %s90, %s91
      %p95 = pneg %p89
      %p96 = scmp.eq.s32.totalorder %s16, 1
      %p97 = por %p95, %p96
      %p98 = scmp.ne.s32.totalorder %s90, %s93
      %p99 = scmp.eq.s32.totalorder %s16, 0
      %p100 = por %p98, %p99
      %p101 = scmp.ne.s32.totalorder %s90, %s93
      %p102 = scmp.eq.s32.totalorder %s21, 1
      %p103 = por %p101, %p102
      %p104 = scmp.ne.s32.totalorder %s93, %s94
      %p105 = scmp.eq.s32.totalorder %s21, 0
      %p106 = por %p104, %p105
      %p107 = scmp.ne.s32.totalorder %s93, %s94
      %p108 = scmp.eq.s32.totalorder %s22, 1
      %p109 = por %p107, %p108
      %p111 = scmp.ne.s32.totalorder %s94, %s110
      %p112 = scmp.eq.s32.totalorder %s22, 0
      %p113 = por %p111, %p112
      %s114 = ssub.s32 %s24, %s31
      %p115 = scmp.eq.s32.totalorder %s114, 0
      %s117 = sadd.s32 %s116, 1
      %s118 = scalar_select %p115, %s116, %s117
      %p121 = pneg %p115
      %p122 = scmp.eq.s32.totalorder %s16, 1
      %p123 = por %p121, %p122
      %p124 = scmp.ne.s32.totalorder %s116, %s119
      %p125 = scmp.eq.s32.totalorder %s16, 0
      %p126 = por %p124, %p125
      %p127 = scmp.ne.s32.totalorder %s116, %s119
      %p128 = scmp.eq.s32.totalorder %s21, 1
      %p129 = por %p127, %p128
      %p130 = scmp.ne.s32.totalorder %s119, %s120
      %p131 = scmp.eq.s32.totalorder %s21, 0
      %p132 = por %p130, %p131
      %p133 = scmp.ne.s32.totalorder %s119, %s120
      %p134 = scmp.eq.s32.totalorder %s22, 1
      %p135 = por %p133, %p134
      %p137 = scmp.ne.s32.totalorder %s120, %s136
      %p138 = scmp.eq.s32.totalorder %s22, 0
      %p139 = por %p137, %p138
      %s140 = ssub.s32 %s23, %s35
      %s141 = ssub.s32 %s24, %s31
      %s142 = sor.u32 %s140, %s141
      %p143 = scmp.eq.s32.totalorder %s142, 0
      %s145 = sadd.s32 %s144, 1
      %s146 = scalar_select %p143, %s144, %s145
      %p149 = pneg %p143
      %p150 = scmp.eq.s32.totalorder %s16, 1
      %p151 = por %p149, %p150
      %p152 = scmp.ne.s32.totalorder %s144, %s147
      %p153 = scmp.eq.s32.totalorder %s16, 0
      %p154 = por %p152, %p153
      %p155 = scmp.ne.s32.totalorder %s144, %s147
      %p156 = scmp.eq.s32.totalorder %s21, 1
      %p157 = por %p155, %p156
      %p158 = scmp.ne.s32.totalorder %s147, %s148
      %p159 = scmp.eq.s32.totalorder %s21, 0
      %p160 = por %p158, %p159
      %p161 = scmp.ne.s32.totalorder %s147, %s148
      %p162 = scmp.eq.s32.totalorder %s22, 1
      %p163 = por %p161, %p162
      %p165 = scmp.ne.s32.totalorder %s148, %s164
      %p166 = scmp.eq.s32.totalorder %s22, 0
      %p167 = por %p165, %p166
      %p168 = scmp.le.s32.totalorder 1, %s16
      %p169 = scmp.lt.s32.totalorder %s16, 3
      %p170 = pnand %p168, %p169
      %p171 = pneg %p170
      // Predicated region
      $region9: #{fc_forward.1} parent=5 // pred_check
        _
      $region10: #{fc_forward.1} parent=5 // pred_check_branch
        %173 = sbr.rel (%p170) target = $region12
      $region11: #{fc_forward.1} parent=5 // pred_region
        %s174 = ssub.s32 %s16, 1
        // Predicated region
        $region13: #{fc_forward.1} parent=11 // pred_check
          %p175 = pneg %p54
        $region14: #{fc_forward.1} parent=11 // pred_check_branch
          %177 = sbr.rel (%p175) target = $region16
        $region15: #{fc_forward.1} parent=11 // pred_region
          %p178 = scmp.lt.s32.totalorder %s25, 0
          %s179 = scalar_select %p178, %s25, 0
          %s180 = smul.addr %s179, 4
          %s181 = scalar_lea.vmem %s0, %s180
        $region16: #{fc_forward.1} parent=11 // pred_fallthru
          _
        // Predicated region
        $region17: #{fc_forward.1} parent=11 // pred_check
          %p182 = pneg %p80
        $region18: #{fc_forward.1} parent=11 // pred_check_branch
          %184 = sbr.rel (%p182) target = $region20
        $region19: #{fc_forward.1} parent=11 // pred_region
          %p185 = scmp.lt.s32.totalorder %s25, 0
          %s186 = scalar_select %p185, %s25, 0
          %s187 = smul.addr %s186, 8
          %s188 = scalar_lea.vmem %s1, %s187
        $region20: #{fc_forward.1} parent=11 // pred_fallthru
          _
        // Predicated region
        $region21: #{fc_forward.1} parent=11 // pred_check
          %p189 = pneg %p106
        $region22: #{fc_forward.1} parent=11 // pred_check_branch
          %191 = sbr.rel (%p189) target = $region24
        $region23: #{fc_forward.1} parent=11 // pred_region
          %p192 = scmp.lt.s32.totalorder %s25, 0
          %s193 = scalar_select %p192, %s25, 0
          %s194 = smul.addr %s193, 8
          %s195 = scalar_lea.vmem %s2, %s194
        $region24: #{fc_forward.1} parent=11 // pred_fallthru
          _
      $region12: #{fc_forward.1} parent=5 // pred_fallthru
        _
      %p196 = scmp.lt.s32.totalorder %s16, 2
      // Predicated region
      $region25: #{fc_forward.1} parent=5 // pred_check
        %p197 = pneg %p196
      $region26: #{fc_forward.1} parent=5 // pred_check_branch
        %199 = sbr.rel (%p197) target = $region28
      $region27: #{fc_forward.1} parent=5 // pred_region
        // Predicated region
        $region29: #{fc_forward.1} parent=27 // pred_check
          %p200 = pneg %p126
        $region30: #{fc_forward.1} parent=27 // pred_check_branch
          %202 = sbr.rel (%p200) target = $region32
        $region31: #{fc_forward.1} parent=27 // pred_region
          %s203 = sand.u32 %s116, 1
          %s204 = scalar_lea.sflag [#allocation3], %s203
          %s205 = sand.u32 %s116, 1
          %s206 = smul.addr %s205, 512
          %s207 = scalar_lea.vmem [#allocation2], %s206
          %s208 = smul.u32 128, %s24
          %s210 = ssub.s32 8192, 8192
          %211 = vsyncadd %s204, %s210
          %s212 = smul.addr %s208, 64
          %s213 = scalar_lea.hbm %s3, %s212
          %s214 = sshll.u32 %s207, 4
          %s215 = int_to_ptr.vmem [resolvable:$true] %s214
          %220 = dma.hbm_to_vmem [thread:$0]  %s213, 8192, %s215, %s204, 64, 64, 4
        $region32: #{fc_forward.1} parent=27 // pred_fallthru
          _
      $region28: #{fc_forward.1} parent=5 // pred_fallthru
        _
      %p221 = scmp.le.s32.totalorder 1, %s16
      %p222 = scmp.lt.s32.totalorder %s16, 3
      %p223 = pnand %p221, %p222
      %p224 = pneg %p223
      // Predicated region
      $region33: #{fc_forward.1} parent=5 // pred_check
        _
      $region34: #{fc_forward.1} parent=5 // pred_check_branch
        %226 = sbr.rel (%p223) target = $region36
      $region35: #{fc_forward.1} parent=5 // pred_region
        %s227 = ssub.s32 %s16, 1
        %s228 = sand.u32 %s119, 1
        %s229 = scalar_lea.sflag [#allocation3], %s228
        %s230 = sand.u32 %s119, 1
        %s231 = smul.addr %s230, 512
        %s232 = scalar_lea.vmem [#allocation2], %s231
        // Predicated region
        $region37: #{fc_forward.1} parent=35 // pred_check
          %p233 = pneg %p132
        $region38: #{fc_forward.1} parent=35 // pred_check_branch
          %235 = sbr.rel (%p233) target = $region40
        $region39: #{fc_forward.1} parent=35 // pred_region
          %236 = dma.done %s229, 8192
        $region40: #{fc_forward.1} parent=35 // pred_fallthru
          _
        %p237 = scmp.lt.s32.totalorder %s25, 0
        %s238 = scalar_select %p237, %s25, 0
        %s239 = smul.addr %s238, 4
        %s240 = scalar_lea.vmem %s0, %s239
        %p241 = pneg %p54
        %p242 = pneg %p51
        %p243 = scmp.lt.s32.totalorder %s25, 0
        %s244 = scalar_select %p243, %s25, 0
        %s245 = smul.addr %s244, 8
        %s246 = scalar_lea.vmem %s1, %s245
        %p247 = pneg %p80
        %p248 = pneg %p77
        %p249 = scmp.lt.s32.totalorder %s25, 0
        %s250 = scalar_select %p249, %s25, 0
        %s251 = smul.addr %s250, 8
        %s252 = scalar_lea.vmem %s2, %s251
        %p253 = pneg %p106
        %p254 = pneg %p103
        %s255 = sand.u32 %s119, 1
        %s256 = scalar_lea.sflag [#allocation3], %s255
        %s257 = sand.u32 %s119, 1
        %s258 = smul.addr %s257, 512
        %s259 = scalar_lea.vmem [#allocation2], %s258
        %p260 = pneg %p132
        %p261 = pneg %p129
        %p262 = pneg %p160
        %p263 = pneg %p157
        %s264 = sand.u32 %s147, 1
        %s265 = scalar_lea.sflag [#allocation4], %s264
        %s266 = sand.u32 %s147, 1
        %s267 = smul.addr %s266, 64
        %s268 = scalar_lea.vmem [#allocation5], %s267
        %p269 = scmp.lt.s32.totalorder %s25, 0
        %s270 = scalar_select %p269, %s25, 0
        %s271 = smul.addr %s270, 4
        %s272 = scalar_lea.vmem %s0, %s271
        %p273 = scmp.lt.s32.totalorder %s25, 0
        %s274 = scalar_select %p273, %s25, 0
        %s275 = smul.addr %s274, 8
        %s276 = scalar_lea.vmem %s1, %s275
        %p277 = scmp.lt.s32.totalorder %s25, 0
        %s278 = scalar_select %p277, %s25, 0
        %s279 = smul.addr %s278, 8
        %s280 = scalar_lea.vmem %s2, %s279
        %s281 = smul.u32 128, %s26
        %s282 = smul.u32 8, %s26
        %v284 = vld [vmem:[%s232] sm:$0xf]
        %v285 = vld [vmem:[%s232 + $0x4] sm:$0xf]
        %v286 = vld [vmem:[%s232 + $0x8] sm:$0xf]
        %v287 = vld [vmem:[%s232 + $0xc] sm:$0xf]
        %v288 = vld [vmem:[%s232 + $0x10] sm:$0xf]
        %v289 = vld [vmem:[%s232 + $0x14] sm:$0xf]
        %v290 = vld [vmem:[%s232 + $0x18] sm:$0xf]
        %v291 = vld [vmem:[%s232 + $0x1c] sm:$0xf]
        %v292 = vld [vmem:[%s232 + $0x20] sm:$0xf]
        %v293 = vld [vmem:[%s232 + $0x24] sm:$0xf]
        %v294 = vld [vmem:[%s232 + $0x28] sm:$0xf]
        %v295 = vld [vmem:[%s232 + $0x2c] sm:$0xf]
        %v296 = vld [vmem:[%s232 + $0x30] sm:$0xf]
        %v297 = vld [vmem:[%s232 + $0x34] sm:$0xf]
        %v298 = vld [vmem:[%s232 + $0x38] sm:$0xf]
        %v299 = vld [vmem:[%s232 + $0x3c] sm:$0xf]
        %v300 = vld [vmem:[%s232 + $0x40] sm:$0xf]
        %v301 = vld [vmem:[%s232 + $0x44] sm:$0xf]
        %v302 = vld [vmem:[%s232 + $0x48] sm:$0xf]
        %v303 = vld [vmem:[%s232 + $0x4c] sm:$0xf]
        %v304 = vld [vmem:[%s232 + $0x50] sm:$0xf]
        %v305 = vld [vmem:[%s232 + $0x54] sm:$0xf]
        %v306 = vld [vmem:[%s232 + $0x58] sm:$0xf]
        %v307 = vld [vmem:[%s232 + $0x5c] sm:$0xf]
        %v308 = vld [vmem:[%s232 + $0x60] sm:$0xf]
        %v309 = vld [vmem:[%s232 + $0x64] sm:$0xf]
        %v310 = vld [vmem:[%s232 + $0x68] sm:$0xf]
        %v311 = vld [vmem:[%s232 + $0x6c] sm:$0xf]
        %v312 = vld [vmem:[%s232 + $0x70] sm:$0xf]
        %v313 = vld [vmem:[%s232 + $0x74] sm:$0xf]
        %v314 = vld [vmem:[%s232 + $0x78] sm:$0xf]
        %v315 = vld [vmem:[%s232 + $0x7c] sm:$0xf]
        %v316 = vld [vmem:[%s232 + $0x80] sm:$0xf]
        %v317 = vld [vmem:[%s232 + $0x84] sm:$0xf]
        %v318 = vld [vmem:[%s232 + $0x88] sm:$0xf]
        %v319 = vld [vmem:[%s232 + $0x8c] sm:$0xf]
        %v320 = vld [vmem:[%s232 + $0x90] sm:$0xf]
        %v321 = vld [vmem:[%s232 + $0x94] sm:$0xf]
        %v322 = vld [vmem:[%s232 + $0x98] sm:$0xf]
        %v323 = vld [vmem:[%s232 + $0x9c] sm:$0xf]
        %v324 = vld [vmem:[%s232 + $0xa0] sm:$0xf]
        %v325 = vld [vmem:[%s232 + $0xa4] sm:$0xf]
        %v326 = vld [vmem:[%s232 + $0xa8] sm:$0xf]
        %v327 = vld [vmem:[%s232 + $0xac] sm:$0xf]
        %v328 = vld [vmem:[%s232 + $0xb0] sm:$0xf]
        %v329 = vld [vmem:[%s232 + $0xb4] sm:$0xf]
        %v330 = vld [vmem:[%s232 + $0xb8] sm:$0xf]
        %v331 = vld [vmem:[%s232 + $0xbc] sm:$0xf]
        %v332 = vld [vmem:[%s232 + $0xc0] sm:$0xf]
        %v333 = vld [vmem:[%s232 + $0xc4] sm:$0xf]
        %v334 = vld [vmem:[%s232 + $0xc8] sm:$0xf]
        %v335 = vld [vmem:[%s232 + $0xcc] sm:$0xf]
        %v336 = vld [vmem:[%s232 + $0xd0] sm:$0xf]
        %v337 = vld [vmem:[%s232 + $0xd4] sm:$0xf]
        %v338 = vld [vmem:[%s232 + $0xd8] sm:$0xf]
        %v339 = vld [vmem:[%s232 + $0xdc] sm:$0xf]
        %v340 = vld [vmem:[%s232 + $0xe0] sm:$0xf]
        %v341 = vld [vmem:[%s232 + $0xe4] sm:$0xf]
        %v342 = vld [vmem:[%s232 + $0xe8] sm:$0xf]
        %v343 = vld [vmem:[%s232 + $0xec] sm:$0xf]
        %v344 = vld [vmem:[%s232 + $0xf0] sm:$0xf]
        %v345 = vld [vmem:[%s232 + $0xf4] sm:$0xf]
        %v346 = vld [vmem:[%s232 + $0xf8] sm:$0xf]
        %v347 = vld [vmem:[%s232 + $0xfc] sm:$0xf]
        %v348 = vld [vmem:[%s232 + $0x100] sm:$0xf]
        %v349 = vld [vmem:[%s232 + $0x104] sm:$0xf]
        %v350 = vld [vmem:[%s232 + $0x108] sm:$0xf]
        %v351 = vld [vmem:[%s232 + $0x10c] sm:$0xf]
        %v352 = vld [vmem:[%s232 + $0x110] sm:$0xf]
        %v353 = vld [vmem:[%s232 + $0x114] sm:$0xf]
        %v354 = vld [vmem:[%s232 + $0x118] sm:$0xf]
        %v355 = vld [vmem:[%s232 + $0x11c] sm:$0xf]
        %v356 = vld [vmem:[%s232 + $0x120] sm:$0xf]
        %v357 = vld [vmem:[%s232 + $0x124] sm:$0xf]
        %v358 = vld [vmem:[%s232 + $0x128] sm:$0xf]
        %v359 = vld [vmem:[%s232 + $0x12c] sm:$0xf]
        %v360 = vld [vmem:[%s232 + $0x130] sm:$0xf]
        %v361 = vld [vmem:[%s232 + $0x134] sm:$0xf]
        %v362 = vld [vmem:[%s232 + $0x138] sm:$0xf]
        %v363 = vld [vmem:[%s232 + $0x13c] sm:$0xf]
        %v364 = vld [vmem:[%s232 + $0x140] sm:$0xf]
        %v365 = vld [vmem:[%s232 + $0x144] sm:$0xf]
        %v366 = vld [vmem:[%s232 + $0x148] sm:$0xf]
        %v367 = vld [vmem:[%s232 + $0x14c] sm:$0xf]
        %v368 = vld [vmem:[%s232 + $0x150] sm:$0xf]
        %v369 = vld [vmem:[%s232 + $0x154] sm:$0xf]
        %v370 = vld [vmem:[%s232 + $0x158] sm:$0xf]
        %v371 = vld [vmem:[%s232 + $0x15c] sm:$0xf]
        %v372 = vld [vmem:[%s232 + $0x160] sm:$0xf]
        %v373 = vld [vmem:[%s232 + $0x164] sm:$0xf]
        %v374 = vld [vmem:[%s232 + $0x168] sm:$0xf]
        %v375 = vld [vmem:[%s232 + $0x16c] sm:$0xf]
        %v376 = vld [vmem:[%s232 + $0x170] sm:$0xf]
        %v377 = vld [vmem:[%s232 + $0x174] sm:$0xf]
        %v378 = vld [vmem:[%s232 + $0x178] sm:$0xf]
        %v379 = vld [vmem:[%s232 + $0x17c] sm:$0xf]
        %v380 = vld [vmem:[%s232 + $0x180] sm:$0xf]
        %v381 = vld [vmem:[%s232 + $0x184] sm:$0xf]
        %v382 = vld [vmem:[%s232 + $0x188] sm:$0xf]
        %v383 = vld [vmem:[%s232 + $0x18c] sm:$0xf]
        %v384 = vld [vmem:[%s232 + $0x190] sm:$0xf]
        %v385 = vld [vmem:[%s232 + $0x194] sm:$0xf]
        %v386 = vld [vmem:[%s232 + $0x198] sm:$0xf]
        %v387 = vld [vmem:[%s232 + $0x19c] sm:$0xf]
        %v388 = vld [vmem:[%s232 + $0x1a0] sm:$0xf]
        %v389 = vld [vmem:[%s232 + $0x1a4] sm:$0xf]
        %v390 = vld [vmem:[%s232 + $0x1a8] sm:$0xf]
        %v391 = vld [vmem:[%s232 + $0x1ac] sm:$0xf]
        %v392 = vld [vmem:[%s232 + $0x1b0] sm:$0xf]
        %v393 = vld [vmem:[%s232 + $0x1b4] sm:$0xf]
        %v394 = vld [vmem:[%s232 + $0x1b8] sm:$0xf]
        %v395 = vld [vmem:[%s232 + $0x1bc] sm:$0xf]
        %v396 = vld [vmem:[%s232 + $0x1c0] sm:$0xf]
        %v397 = vld [vmem:[%s232 + $0x1c4] sm:$0xf]
        %v398 = vld [vmem:[%s232 + $0x1c8] sm:$0xf]
        %v399 = vld [vmem:[%s232 + $0x1cc] sm:$0xf]
        %v400 = vld [vmem:[%s232 + $0x1d0] sm:$0xf]
        %v401 = vld [vmem:[%s232 + $0x1d4] sm:$0xf]
        %v402 = vld [vmem:[%s232 + $0x1d8] sm:$0xf]
        %v403 = vld [vmem:[%s232 + $0x1dc] sm:$0xf]
        %v404 = vld [vmem:[%s232 + $0x1e0] sm:$0xf]
        %v405 = vld [vmem:[%s232 + $0x1e4] sm:$0xf]
        %v406 = vld [vmem:[%s232 + $0x1e8] sm:$0xf]
        %v407 = vld [vmem:[%s232 + $0x1ec] sm:$0xf]
        %v408 = vld [vmem:[%s232 + $0x1f0] sm:$0xf]
        %v409 = vld [vmem:[%s232 + $0x1f4] sm:$0xf]
        %v410 = vld [vmem:[%s232 + $0x1f8] sm:$0xf]
        %v411 = vld [vmem:[%s232 + $0x1fc] sm:$0xf]
        %v412 = vunpack.c.l.bf16 %v284
        %v413 = vunpack.c.l.bf16 %v285
        %v414 = vunpack.c.l.bf16 %v286
        %v415 = vunpack.c.l.bf16 %v287
        %v416 = vunpack.c.l.bf16 %v288
        %v417 = vunpack.c.l.bf16 %v289
        %v418 = vunpack.c.l.bf16 %v290
        %v419 = vunpack.c.l.bf16 %v291
        %v420 = vunpack.c.l.bf16 %v292
        %v421 = vunpack.c.l.bf16 %v293
        %v422 = vunpack.c.l.bf16 %v294
        %v423 = vunpack.c.l.bf16 %v295
        %v424 = vunpack.c.l.bf16 %v296
        %v425 = vunpack.c.l.bf16 %v297
        %v426 = vunpack.c.l.bf16 %v298
        %v427 = vunpack.c.l.bf16 %v299
        %v428 = vunpack.c.l.bf16 %v300
        %v429 = vunpack.c.l.bf16 %v301
        %v430 = vunpack.c.l.bf16 %v302
        %v431 = vunpack.c.l.bf16 %v303
        %v432 = vunpack.c.l.bf16 %v304
        %v433 = vunpack.c.l.bf16 %v305
        %v434 = vunpack.c.l.bf16 %v306
        %v435 = vunpack.c.l.bf16 %v307
        %v436 = vunpack.c.l.bf16 %v308
        %v437 = vunpack.c.l.bf16 %v309
        %v438 = vunpack.c.l.bf16 %v310
        %v439 = vunpack.c.l.bf16 %v311
        %v440 = vunpack.c.l.bf16 %v312
        %v441 = vunpack.c.l.bf16 %v313
        %v442 = vunpack.c.l.bf16 %v314
        %v443 = vunpack.c.l.bf16 %v315
        %v444 = vunpack.c.l.bf16 %v316
        %v445 = vunpack.c.l.bf16 %v317
        %v446 = vunpack.c.l.bf16 %v318
        %v447 = vunpack.c.l.bf16 %v319
        %v448 = vunpack.c.l.bf16 %v320
        %v449 = vunpack.c.l.bf16 %v321
        %v450 = vunpack.c.l.bf16 %v322
        %v451 = vunpack.c.l.bf16 %v323
        %v452 = vunpack.c.l.bf16 %v324
        %v453 = vunpack.c.l.bf16 %v325
        %v454 = vunpack.c.l.bf16 %v326
        %v455 = vunpack.c.l.bf16 %v327
        %v456 = vunpack.c.l.bf16 %v328
        %v457 = vunpack.c.l.bf16 %v329
        %v458 = vunpack.c.l.bf16 %v330
        %v459 = vunpack.c.l.bf16 %v331
        %v460 = vunpack.c.l.bf16 %v332
        %v461 = vunpack.c.l.bf16 %v333
        %v462 = vunpack.c.l.bf16 %v334
        %v463 = vunpack.c.l.bf16 %v335
        %v464 = vunpack.c.l.bf16 %v336
        %v465 = vunpack.c.l.bf16 %v337
        %v466 = vunpack.c.l.bf16 %v338
        %v467 = vunpack.c.l.bf16 %v339
        %v468 = vunpack.c.l.bf16 %v340
        %v469 = vunpack.c.l.bf16 %v341
        %v470 = vunpack.c.l.bf16 %v342
        %v471 = vunpack.c.l.bf16 %v343
        %v472 = vunpack.c.l.bf16 %v344
        %v473 = vunpack.c.l.bf16 %v345
        %v474 = vunpack.c.l.bf16 %v346
        %v475 = vunpack.c.l.bf16 %v347
        %v476 = vunpack.c.l.bf16 %v348
        %v477 = vunpack.c.l.bf16 %v349
        %v478 = vunpack.c.l.bf16 %v350
        %v479 = vunpack.c.l.bf16 %v351
        %v480 = vunpack.c.l.bf16 %v352
        %v481 = vunpack.c.l.bf16 %v353
        %v482 = vunpack.c.l.bf16 %v354
        %v483 = vunpack.c.l.bf16 %v355
        %v484 = vunpack.c.l.bf16 %v356
        %v485 = vunpack.c.l.bf16 %v357
        %v486 = vunpack.c.l.bf16 %v358
        %v487 = vunpack.c.l.bf16 %v359
        %v488 = vunpack.c.l.bf16 %v360
        %v489 = vunpack.c.l.bf16 %v361
        %v490 = vunpack.c.l.bf16 %v362
        %v491 = vunpack.c.l.bf16 %v363
        %v492 = vunpack.c.l.bf16 %v364
        %v493 = vunpack.c.l.bf16 %v365
        %v494 = vunpack.c.l.bf16 %v366
        %v495 = vunpack.c.l.bf16 %v367
        %v496 = vunpack.c.l.bf16 %v368
        %v497 = vunpack.c.l.bf16 %v369
        %v498 = vunpack.c.l.bf16 %v370
        %v499 = vunpack.c.l.bf16 %v371
        %v500 = vunpack.c.l.bf16 %v372
        %v501 = vunpack.c.l.bf16 %v373
        %v502 = vunpack.c.l.bf16 %v374
        %v503 = vunpack.c.l.bf16 %v375
        %v504 = vunpack.c.l.bf16 %v376
        %v505 = vunpack.c.l.bf16 %v377
        %v506 = vunpack.c.l.bf16 %v378
        %v507 = vunpack.c.l.bf16 %v379
        %v508 = vunpack.c.l.bf16 %v380
        %v509 = vunpack.c.l.bf16 %v381
        %v510 = vunpack.c.l.bf16 %v382
        %v511 = vunpack.c.l.bf16 %v383
        %v512 = vunpack.c.l.bf16 %v384
        %v513 = vunpack.c.l.bf16 %v385
        %v514 = vunpack.c.l.bf16 %v386
        %v515 = vunpack.c.l.bf16 %v387
        %v516 = vunpack.c.l.bf16 %v388
        %v517 = vunpack.c.l.bf16 %v389
        %v518 = vunpack.c.l.bf16 %v390
        %v519 = vunpack.c.l.bf16 %v391
        %v520 = vunpack.c.l.bf16 %v392
        %v521 = vunpack.c.l.bf16 %v393
        %v522 = vunpack.c.l.bf16 %v394
        %v523 = vunpack.c.l.bf16 %v395
        %v524 = vunpack.c.l.bf16 %v396
        %v525 = vunpack.c.l.bf16 %v397
        %v526 = vunpack.c.l.bf16 %v398
        %v527 = vunpack.c.l.bf16 %v399
        %v528 = vunpack.c.l.bf16 %v400
        %v529 = vunpack.c.l.bf16 %v401
        %v530 = vunpack.c.l.bf16 %v402
        %v531 = vunpack.c.l.bf16 %v403
        %v532 = vunpack.c.l.bf16 %v404
        %v533 = vunpack.c.l.bf16 %v405
        %v534 = vunpack.c.l.bf16 %v406
        %v535 = vunpack.c.l.bf16 %v407
        %v536 = vunpack.c.l.bf16 %v408
        %v537 = vunpack.c.l.bf16 %v409
        %v538 = vunpack.c.l.bf16 %v410
        %v539 = vunpack.c.l.bf16 %v411
        %v540 = vmul.f32 %v412, %v412
        %v541 = vmul.f32 %v413, %v413
        %v542 = vmul.f32 %v414, %v414
        %v543 = vmul.f32 %v415, %v415
        %v544 = vmul.f32 %v416, %v416
        %v545 = vmul.f32 %v417, %v417
        %v546 = vmul.f32 %v418, %v418
        %v547 = vmul.f32 %v419, %v419
        %v548 = vmul.f32 %v420, %v420
        %v549 = vmul.f32 %v421, %v421
        %v550 = vmul.f32 %v422, %v422
        %v551 = vmul.f32 %v423, %v423
        %v552 = vmul.f32 %v424, %v424
        %v553 = vmul.f32 %v425, %v425
        %v554 = vmul.f32 %v426, %v426
        %v555 = vmul.f32 %v427, %v427
        %v556 = vmul.f32 %v428, %v428
        %v557 = vmul.f32 %v429, %v429
        %v558 = vmul.f32 %v430, %v430
        %v559 = vmul.f32 %v431, %v431
        %v560 = vmul.f32 %v432, %v432
        %v561 = vmul.f32 %v433, %v433
        %v562 = vmul.f32 %v434, %v434
        %v563 = vmul.f32 %v435, %v435
        %v564 = vmul.f32 %v436, %v436
        %v565 = vmul.f32 %v437, %v437
        %v566 = vmul.f32 %v438, %v438
        %v567 = vmul.f32 %v439, %v439
        %v568 = vmul.f32 %v440, %v440
        %v569 = vmul.f32 %v441, %v441
        %v570 = vmul.f32 %v442, %v442
        %v571 = vmul.f32 %v443, %v443
        %v572 = vmul.f32 %v444, %v444
        %v573 = vmul.f32 %v445, %v445
        %v574 = vmul.f32 %v446, %v446
        %v575 = vmul.f32 %v447, %v447
        %v576 = vmul.f32 %v448, %v448
        %v577 = vmul.f32 %v449, %v449
        %v578 = vmul.f32 %v450, %v450
        %v579 = vmul.f32 %v451, %v451
        %v580 = vmul.f32 %v452, %v452
        %v581 = vmul.f32 %v453, %v453
        %v582 = vmul.f32 %v454, %v454
        %v583 = vmul.f32 %v455, %v455
        %v584 = vmul.f32 %v456, %v456
        %v585 = vmul.f32 %v457, %v457
        %v586 = vmul.f32 %v458, %v458
        %v587 = vmul.f32 %v459, %v459
        %v588 = vmul.f32 %v460, %v460
        %v589 = vmul.f32 %v461, %v461
        %v590 = vmul.f32 %v462, %v462
        %v591 = vmul.f32 %v463, %v463
        %v592 = vmul.f32 %v464, %v464
        %v593 = vmul.f32 %v465, %v465
        %v594 = vmul.f32 %v466, %v466
        %v595 = vmul.f32 %v467, %v467
        %v596 = vmul.f32 %v468, %v468
        %v597 = vmul.f32 %v469, %v469
        %v598 = vmul.f32 %v470, %v470
        %v599 = vmul.f32 %v471, %v471
        %v600 = vmul.f32 %v472, %v472
        %v601 = vmul.f32 %v473, %v473
        %v602 = vmul.f32 %v474, %v474
        %v603 = vmul.f32 %v475, %v475
        %v604 = vmul.f32 %v476, %v476
        %v605 = vmul.f32 %v477, %v477
        %v606 = vmul.f32 %v478, %v478
        %v607 = vmul.f32 %v479, %v479
        %v608 = vmul.f32 %v480, %v480
        %v609 = vmul.f32 %v481, %v481
        %v610 = vmul.f32 %v482, %v482
        %v611 = vmul.f32 %v483, %v483
        %v612 = vmul.f32 %v484, %v484
        %v613 = vmul.f32 %v485, %v485
        %v614 = vmul.f32 %v486, %v486
        %v615 = vmul.f32 %v487, %v487
        %v616 = vmul.f32 %v488, %v488
        %v617 = vmul.f32 %v489, %v489
        %v618 = vmul.f32 %v490, %v490
        %v619 = vmul.f32 %v491, %v491
        %v620 = vmul.f32 %v492, %v492
        %v621 = vmul.f32 %v493, %v493
        %v622 = vmul.f32 %v494, %v494
        %v623 = vmul.f32 %v495, %v495
        %v624 = vmul.f32 %v496, %v496
        %v625 = vmul.f32 %v497, %v497
        %v626 = vmul.f32 %v498, %v498
        %v627 = vmul.f32 %v499, %v499
        %v628 = vmul.f32 %v500, %v500
        %v629 = vmul.f32 %v501, %v501
        %v630 = vmul.f32 %v502, %v502
        %v631 = vmul.f32 %v503, %v503
        %v632 = vmul.f32 %v504, %v504
        %v633 = vmul.f32 %v505, %v505
        %v634 = vmul.f32 %v506, %v506
        %v635 = vmul.f32 %v507, %v507
        %v636 = vmul.f32 %v508, %v508
        %v637 = vmul.f32 %v509, %v509
        %v638 = vmul.f32 %v510, %v510
        %v639 = vmul.f32 %v511, %v511
        %v640 = vmul.f32 %v512, %v512
        %v641 = vmul.f32 %v513, %v513
        %v642 = vmul.f32 %v514, %v514
        %v643 = vmul.f32 %v515, %v515
        %v644 = vmul.f32 %v516, %v516
        %v645 = vmul.f32 %v517, %v517
        %v646 = vmul.f32 %v518, %v518
        %v647 = vmul.f32 %v519, %v519
        %v648 = vmul.f32 %v520, %v520
        %v649 = vmul.f32 %v521, %v521
        %v650 = vmul.f32 %v522, %v522
        %v651 = vmul.f32 %v523, %v523
        %v652 = vmul.f32 %v524, %v524
        %v653 = vmul.f32 %v525, %v525
        %v654 = vmul.f32 %v526, %v526
        %v655 = vmul.f32 %v527, %v527
        %v656 = vmul.f32 %v528, %v528
        %v657 = vmul.f32 %v529, %v529
        %v658 = vmul.f32 %v530, %v530
        %v659 = vmul.f32 %v531, %v531
        %v660 = vmul.f32 %v532, %v532
        %v661 = vmul.f32 %v533, %v533
        %v662 = vmul.f32 %v534, %v534
        %v663 = vmul.f32 %v535, %v535
        %v664 = vmul.f32 %v536, %v536
        %v665 = vmul.f32 %v537, %v537
        %v666 = vmul.f32 %v538, %v538
        %v667 = vmul.f32 %v539, %v539
        %668 = vadd.xlane.f32.xlu0 %v540
        %v669 = vpop.xlane.xlu0 %668
        %670 = vadd.xlane.f32.xlu0 %v541
        %v671 = vpop.xlane.xlu0 %670
        %672 = vadd.xlane.f32.xlu0 %v542
        %v673 = vpop.xlane.xlu0 %672
        %674 = vadd.xlane.f32.xlu0 %v543
        %v675 = vpop.xlane.xlu0 %674
        %676 = vadd.xlane.f32.xlu0 %v544
        %v677 = vpop.xlane.xlu0 %676
        %678 = vadd.xlane.f32.xlu0 %v545
        %v679 = vpop.xlane.xlu0 %678
        %680 = vadd.xlane.f32.xlu0 %v546
        %v681 = vpop.xlane.xlu0 %680
        %682 = vadd.xlane.f32.xlu0 %v547
        %v683 = vpop.xlane.xlu0 %682
        %684 = vadd.xlane.f32.xlu0 %v548
        %v685 = vpop.xlane.xlu0 %684
        %686 = vadd.xlane.f32.xlu0 %v549
        %v687 = vpop.xlane.xlu0 %686
        %688 = vadd.xlane.f32.xlu0 %v550
        %v689 = vpop.xlane.xlu0 %688
        %690 = vadd.xlane.f32.xlu0 %v551
        %v691 = vpop.xlane.xlu0 %690
        %692 = vadd.xlane.f32.xlu0 %v552
        %v693 = vpop.xlane.xlu0 %692
        %694 = vadd.xlane.f32.xlu0 %v553
        %v695 = vpop.xlane.xlu0 %694
        %696 = vadd.xlane.f32.xlu0 %v554
        %v697 = vpop.xlane.xlu0 %696
        %698 = vadd.xlane.f32.xlu0 %v555
        %v699 = vpop.xlane.xlu0 %698
        %700 = vadd.xlane.f32.xlu0 %v556
        %v701 = vpop.xlane.xlu0 %700
        %702 = vadd.xlane.f32.xlu0 %v557
        %v703 = vpop.xlane.xlu0 %702
        %704 = vadd.xlane.f32.xlu0 %v558
        %v705 = vpop.xlane.xlu0 %704
        %706 = vadd.xlane.f32.xlu0 %v559
        %v707 = vpop.xlane.xlu0 %706
        %708 = vadd.xlane.f32.xlu0 %v560
        %v709 = vpop.xlane.xlu0 %708
        %710 = vadd.xlane.f32.xlu0 %v561
        %v711 = vpop.xlane.xlu0 %710
        %712 = vadd.xlane.f32.xlu0 %v562
        %v713 = vpop.xlane.xlu0 %712
        %714 = vadd.xlane.f32.xlu0 %v563
        %v715 = vpop.xlane.xlu0 %714
        %716 = vadd.xlane.f32.xlu0 %v564
        %v717 = vpop.xlane.xlu0 %716
        %718 = vadd.xlane.f32.xlu0 %v565
        %v719 = vpop.xlane.xlu0 %718
        %720 = vadd.xlane.f32.xlu0 %v566
        %v721 = vpop.xlane.xlu0 %720
        %722 = vadd.xlane.f32.xlu0 %v567
        %v723 = vpop.xlane.xlu0 %722
        %724 = vadd.xlane.f32.xlu0 %v568
        %v725 = vpop.xlane.xlu0 %724
        %726 = vadd.xlane.f32.xlu0 %v569
        %v727 = vpop.xlane.xlu0 %726
        %728 = vadd.xlane.f32.xlu0 %v570
        %v729 = vpop.xlane.xlu0 %728
        %730 = vadd.xlane.f32.xlu0 %v571
        %v731 = vpop.xlane.xlu0 %730
        %732 = vadd.xlane.f32.xlu0 %v572
        %v733 = vpop.xlane.xlu0 %732
        %734 = vadd.xlane.f32.xlu0 %v573
        %v735 = vpop.xlane.xlu0 %734
        %736 = vadd.xlane.f32.xlu0 %v574
        %v737 = vpop.xlane.xlu0 %736
        %738 = vadd.xlane.f32.xlu0 %v575
        %v739 = vpop.xlane.xlu0 %738
        %740 = vadd.xlane.f32.xlu0 %v576
        %v741 = vpop.xlane.xlu0 %740
        %742 = vadd.xlane.f32.xlu0 %v577
        %v743 = vpop.xlane.xlu0 %742
        %744 = vadd.xlane.f32.xlu0 %v578
        %v745 = vpop.xlane.xlu0 %744
        %746 = vadd.xlane.f32.xlu0 %v579
        %v747 = vpop.xlane.xlu0 %746
        %748 = vadd.xlane.f32.xlu0 %v580
        %v749 = vpop.xlane.xlu0 %748
        %750 = vadd.xlane.f32.xlu0 %v581
        %v751 = vpop.xlane.xlu0 %750
        %752 = vadd.xlane.f32.xlu0 %v582
        %v753 = vpop.xlane.xlu0 %752
        %754 = vadd.xlane.f32.xlu0 %v583
        %v755 = vpop.xlane.xlu0 %754
        %756 = vadd.xlane.f32.xlu0 %v584
        %v757 = vpop.xlane.xlu0 %756
        %758 = vadd.xlane.f32.xlu0 %v585
        %v759 = vpop.xlane.xlu0 %758
        %760 = vadd.xlane.f32.xlu0 %v586
        %v761 = vpop.xlane.xlu0 %760
        %762 = vadd.xlane.f32.xlu0 %v587
        %v763 = vpop.xlane.xlu0 %762
        %764 = vadd.xlane.f32.xlu0 %v588
        %v765 = vpop.xlane.xlu0 %764
        %766 = vadd.xlane.f32.xlu0 %v589
        %v767 = vpop.xlane.xlu0 %766
        %768 = vadd.xlane.f32.xlu0 %v590
        %v769 = vpop.xlane.xlu0 %768
        %770 = vadd.xlane.f32.xlu0 %v591
        %v771 = vpop.xlane.xlu0 %770
        %772 = vadd.xlane.f32.xlu0 %v592
        %v773 = vpop.xlane.xlu0 %772
        %774 = vadd.xlane.f32.xlu0 %v593
        %v775 = vpop.xlane.xlu0 %774
        %776 = vadd.xlane.f32.xlu0 %v594
        %v777 = vpop.xlane.xlu0 %776
        %778 = vadd.xlane.f32.xlu0 %v595
        %v779 = vpop.xlane.xlu0 %778
        %780 = vadd.xlane.f32.xlu0 %v596
        %v781 = vpop.xlane.xlu0 %780
        %782 = vadd.xlane.f32.xlu0 %v597
        %v783 = vpop.xlane.xlu0 %782
        %784 = vadd.xlane.f32.xlu0 %v598
        %v785 = vpop.xlane.xlu0 %784
        %786 = vadd.xlane.f32.xlu0 %v599
        %v787 = vpop.xlane.xlu0 %786
        %788 = vadd.xlane.f32.xlu0 %v600
        %v789 = vpop.xlane.xlu0 %788
        %790 = vadd.xlane.f32.xlu0 %v601
        %v791 = vpop.xlane.xlu0 %790
        %792 = vadd.xlane.f32.xlu0 %v602
        %v793 = vpop.xlane.xlu0 %792
        %794 = vadd.xlane.f32.xlu0 %v603
        %v795 = vpop.xlane.xlu0 %794
        %796 = vadd.xlane.f32.xlu0 %v604
        %v797 = vpop.xlane.xlu0 %796
        %798 = vadd.xlane.f32.xlu0 %v605
        %v799 = vpop.xlane.xlu0 %798
        %800 = vadd.xlane.f32.xlu0 %v606
        %v801 = vpop.xlane.xlu0 %800
        %802 = vadd.xlane.f32.xlu0 %v607
        %v803 = vpop.xlane.xlu0 %802
        %804 = vadd.xlane.f32.xlu0 %v608
        %v805 = vpop.xlane.xlu0 %804
        %806 = vadd.xlane.f32.xlu0 %v609
        %v807 = vpop.xlane.xlu0 %806
        %808 = vadd.xlane.f32.xlu0 %v610
        %v809 = vpop.xlane.xlu0 %808
        %810 = vadd.xlane.f32.xlu0 %v611
        %v811 = vpop.xlane.xlu0 %810
        %812 = vadd.xlane.f32.xlu0 %v612
        %v813 = vpop.xlane.xlu0 %812
        %814 = vadd.xlane.f32.xlu0 %v613
        %v815 = vpop.xlane.xlu0 %814
        %816 = vadd.xlane.f32.xlu0 %v614
        %v817 = vpop.xlane.xlu0 %816
        %818 = vadd.xlane.f32.xlu0 %v615
        %v819 = vpop.xlane.xlu0 %818
        %820 = vadd.xlane.f32.xlu0 %v616
        %v821 = vpop.xlane.xlu0 %820
        %822 = vadd.xlane.f32.xlu0 %v617
        %v823 = vpop.xlane.xlu0 %822
        %824 = vadd.xlane.f32.xlu0 %v618
        %v825 = vpop.xlane.xlu0 %824
        %826 = vadd.xlane.f32.xlu0 %v619
        %v827 = vpop.xlane.xlu0 %826
        %828 = vadd.xlane.f32.xlu0 %v620
        %v829 = vpop.xlane.xlu0 %828
        %830 = vadd.xlane.f32.xlu0 %v621
        %v831 = vpop.xlane.xlu0 %830
        %832 = vadd.xlane.f32.xlu0 %v622
        %v833 = vpop.xlane.xlu0 %832
        %834 = vadd.xlane.f32.xlu0 %v623
        %v835 = vpop.xlane.xlu0 %834
        %836 = vadd.xlane.f32.xlu0 %v624
        %v837 = vpop.xlane.xlu0 %836
        %838 = vadd.xlane.f32.xlu0 %v625
        %v839 = vpop.xlane.xlu0 %838
        %840 = vadd.xlane.f32.xlu0 %v626
        %v841 = vpop.xlane.xlu0 %840
        %842 = vadd.xlane.f32.xlu0 %v627
        %v843 = vpop.xlane.xlu0 %842
        %844 = vadd.xlane.f32.xlu0 %v628
        %v845 = vpop.xlane.xlu0 %844
        %846 = vadd.xlane.f32.xlu0 %v629
        %v847 = vpop.xlane.xlu0 %846
        %848 = vadd.xlane.f32.xlu0 %v630
        %v849 = vpop.xlane.xlu0 %848
        %850 = vadd.xlane.f32.xlu0 %v631
        %v851 = vpop.xlane.xlu0 %850
        %852 = vadd.xlane.f32.xlu0 %v632
        %v853 = vpop.xlane.xlu0 %852
        %854 = vadd.xlane.f32.xlu0 %v633
        %v855 = vpop.xlane.xlu0 %854
        %856 = vadd.xlane.f32.xlu0 %v634
        %v857 = vpop.xlane.xlu0 %856
        %858 = vadd.xlane.f32.xlu0 %v635
        %v859 = vpop.xlane.xlu0 %858
        %860 = vadd.xlane.f32.xlu0 %v636
        %v861 = vpop.xlane.xlu0 %860
        %862 = vadd.xlane.f32.xlu0 %v637
        %v863 = vpop.xlane.xlu0 %862
        %864 = vadd.xlane.f32.xlu0 %v638
        %v865 = vpop.xlane.xlu0 %864
        %866 = vadd.xlane.f32.xlu0 %v639
        %v867 = vpop.xlane.xlu0 %866
        %868 = vadd.xlane.f32.xlu0 %v640
        %v869 = vpop.xlane.xlu0 %868
        %870 = vadd.xlane.f32.xlu0 %v641
        %v871 = vpop.xlane.xlu0 %870
        %872 = vadd.xlane.f32.xlu0 %v642
        %v873 = vpop.xlane.xlu0 %872
        %874 = vadd.xlane.f32.xlu0 %v643
        %v875 = vpop.xlane.xlu0 %874
        %876 = vadd.xlane.f32.xlu0 %v644
        %v877 = vpop.xlane.xlu0 %876
        %878 = vadd.xlane.f32.xlu0 %v645
        %v879 = vpop.xlane.xlu0 %878
        %880 = vadd.xlane.f32.xlu0 %v646
        %v881 = vpop.xlane.xlu0 %880
        %882 = vadd.xlane.f32.xlu0 %v647
        %v883 = vpop.xlane.xlu0 %882
        %884 = vadd.xlane.f32.xlu0 %v648
        %v885 = vpop.xlane.xlu0 %884
        %886 = vadd.xlane.f32.xlu0 %v649
        %v887 = vpop.xlane.xlu0 %886
        %888 = vadd.xlane.f32.xlu0 %v650
        %v889 = vpop.xlane.xlu0 %888
        %890 = vadd.xlane.f32.xlu0 %v651
        %v891 = vpop.xlane.xlu0 %890
        %892 = vadd.xlane.f32.xlu0 %v652
        %v893 = vpop.xlane.xlu0 %892
        %894 = vadd.xlane.f32.xlu0 %v653
        %v895 = vpop.xlane.xlu0 %894
        %896 = vadd.xlane.f32.xlu0 %v654
        %v897 = vpop.xlane.xlu0 %896
        %898 = vadd.xlane.f32.xlu0 %v655
        %v899 = vpop.xlane.xlu0 %898
        %900 = vadd.xlane.f32.xlu0 %v656
        %v901 = vpop.xlane.xlu0 %900
        %902 = vadd.xlane.f32.xlu0 %v657
        %v903 = vpop.xlane.xlu0 %902
        %904 = vadd.xlane.f32.xlu0 %v658
        %v905 = vpop.xlane.xlu0 %904
        %906 = vadd.xlane.f32.xlu0 %v659
        %v907 = vpop.xlane.xlu0 %906
        %908 = vadd.xlane.f32.xlu0 %v660
        %v909 = vpop.xlane.xlu0 %908
        %910 = vadd.xlane.f32.xlu0 %v661
        %v911 = vpop.xlane.xlu0 %910
        %912 = vadd.xlane.f32.xlu0 %v662
        %v913 = vpop.xlane.xlu0 %912
        %914 = vadd.xlane.f32.xlu0 %v663
        %v915 = vpop.xlane.xlu0 %914
        %916 = vadd.xlane.f32.xlu0 %v664
        %v917 = vpop.xlane.xlu0 %916
        %918 = vadd.xlane.f32.xlu0 %v665
        %v919 = vpop.xlane.xlu0 %918
        %920 = vadd.xlane.f32.xlu0 %v666
        %v921 = vpop.xlane.xlu0 %920
        %922 = vadd.xlane.f32.xlu0 %v667
        %v923 = vpop.xlane.xlu0 %922
        %v924 = vmax.f32 %v669, 1e-12
        %v925 = vmax.f32 %v671, 1e-12
        %v926 = vmax.f32 %v673, 1e-12
        %v927 = vmax.f32 %v675, 1e-12
        %v928 = vmax.f32 %v677, 1e-12
        %v929 = vmax.f32 %v679, 1e-12
        %v930 = vmax.f32 %v681, 1e-12
        %v931 = vmax.f32 %v683, 1e-12
        %v932 = vmax.f32 %v685, 1e-12
        %v933 = vmax.f32 %v687, 1e-12
        %v934 = vmax.f32 %v689, 1e-12
        %v935 = vmax.f32 %v691, 1e-12
        %v936 = vmax.f32 %v693, 1e-12
        %v937 = vmax.f32 %v695, 1e-12
        %v938 = vmax.f32 %v697, 1e-12
        %v939 = vmax.f32 %v699, 1e-12
        %v940 = vmax.f32 %v701, 1e-12
        %v941 = vmax.f32 %v703, 1e-12
        %v942 = vmax.f32 %v705, 1e-12
        %v943 = vmax.f32 %v707, 1e-12
        %v944 = vmax.f32 %v709, 1e-12
        %v945 = vmax.f32 %v711, 1e-12
        %v946 = vmax.f32 %v713, 1e-12
        %v947 = vmax.f32 %v715, 1e-12
        %v948 = vmax.f32 %v717, 1e-12
        %v949 = vmax.f32 %v719, 1e-12
        %v950 = vmax.f32 %v721, 1e-12
        %v951 = vmax.f32 %v723, 1e-12
        %v952 = vmax.f32 %v725, 1e-12
        %v953 = vmax.f32 %v727, 1e-12
        %v954 = vmax.f32 %v729, 1e-12
        %v955 = vmax.f32 %v731, 1e-12
        %v956 = vmax.f32 %v733, 1e-12
        %v957 = vmax.f32 %v735, 1e-12
        %v958 = vmax.f32 %v737, 1e-12
        %v959 = vmax.f32 %v739, 1e-12
        %v960 = vmax.f32 %v741, 1e-12
        %v961 = vmax.f32 %v743, 1e-12
        %v962 = vmax.f32 %v745, 1e-12
        %v963 = vmax.f32 %v747, 1e-12
        %v964 = vmax.f32 %v749, 1e-12
        %v965 = vmax.f32 %v751, 1e-12
        %v966 = vmax.f32 %v753, 1e-12
        %v967 = vmax.f32 %v755, 1e-12
        %v968 = vmax.f32 %v757, 1e-12
        %v969 = vmax.f32 %v759, 1e-12
        %v970 = vmax.f32 %v761, 1e-12
        %v971 = vmax.f32 %v763, 1e-12
        %v972 = vmax.f32 %v765, 1e-12
        %v973 = vmax.f32 %v767, 1e-12
        %v974 = vmax.f32 %v769, 1e-12
        %v975 = vmax.f32 %v771, 1e-12
        %v976 = vmax.f32 %v773, 1e-12
        %v977 = vmax.f32 %v775, 1e-12
        %v978 = vmax.f32 %v777, 1e-12
        %v979 = vmax.f32 %v779, 1e-12
        %v980 = vmax.f32 %v781, 1e-12
        %v981 = vmax.f32 %v783, 1e-12
        %v982 = vmax.f32 %v785, 1e-12
        %v983 = vmax.f32 %v787, 1e-12
        %v984 = vmax.f32 %v789, 1e-12
        %v985 = vmax.f32 %v791, 1e-12
        %v986 = vmax.f32 %v793, 1e-12
        %v987 = vmax.f32 %v795, 1e-12
        %v988 = vmax.f32 %v797, 1e-12
        %v989 = vmax.f32 %v799, 1e-12
        %v990 = vmax.f32 %v801, 1e-12
        %v991 = vmax.f32 %v803, 1e-12
        %v992 = vmax.f32 %v805, 1e-12
        %v993 = vmax.f32 %v807, 1e-12
        %v994 = vmax.f32 %v809, 1e-12
        %v995 = vmax.f32 %v811, 1e-12
        %v996 = vmax.f32 %v813, 1e-12
        %v997 = vmax.f32 %v815, 1e-12
        %v998 = vmax.f32 %v817, 1e-12
        %v999 = vmax.f32 %v819, 1e-12
        %v1000 = vmax.f32 %v821, 1e-12
        %v1001 = vmax.f32 %v823, 1e-12
        %v1002 = vmax.f32 %v825, 1e-12
        %v1003 = vmax.f32 %v827, 1e-12
        %v1004 = vmax.f32 %v829, 1e-12
        %v1005 = vmax.f32 %v831, 1e-12
        %v1006 = vmax.f32 %v833, 1e-12
        %v1007 = vmax.f32 %v835, 1e-12
        %v1008 = vmax.f32 %v837, 1e-12
        %v1009 = vmax.f32 %v839, 1e-12
        %v1010 = vmax.f32 %v841, 1e-12
        %v1011 = vmax.f32 %v843, 1e-12
        %v1012 = vmax.f32 %v845, 1e-12
        %v1013 = vmax.f32 %v847, 1e-12
        %v1014 = vmax.f32 %v849, 1e-12
        %v1015 = vmax.f32 %v851, 1e-12
        %v1016 = vmax.f32 %v853, 1e-12
        %v1017 = vmax.f32 %v855, 1e-12
        %v1018 = vmax.f32 %v857, 1e-12
        %v1019 = vmax.f32 %v859, 1e-12
        %v1020 = vmax.f32 %v861, 1e-12
        %v1021 = vmax.f32 %v863, 1e-12
        %v1022 = vmax.f32 %v865, 1e-12
        %v1023 = vmax.f32 %v867, 1e-12
        %v1024 = vmax.f32 %v869, 1e-12
        %v1025 = vmax.f32 %v871, 1e-12
        %v1026 = vmax.f32 %v873, 1e-12
        %v1027 = vmax.f32 %v875, 1e-12
        %v1028 = vmax.f32 %v877, 1e-12
        %v1029 = vmax.f32 %v879, 1e-12
        %v1030 = vmax.f32 %v881, 1e-12
        %v1031 = vmax.f32 %v883, 1e-12
        %v1032 = vmax.f32 %v885, 1e-12
        %v1033 = vmax.f32 %v887, 1e-12
        %v1034 = vmax.f32 %v889, 1e-12
        %v1035 = vmax.f32 %v891, 1e-12
        %v1036 = vmax.f32 %v893, 1e-12
        %v1037 = vmax.f32 %v895, 1e-12
        %v1038 = vmax.f32 %v897, 1e-12
        %v1039 = vmax.f32 %v899, 1e-12
        %v1040 = vmax.f32 %v901, 1e-12
        %v1041 = vmax.f32 %v903, 1e-12
        %v1042 = vmax.f32 %v905, 1e-12
        %v1043 = vmax.f32 %v907, 1e-12
        %v1044 = vmax.f32 %v909, 1e-12
        %v1045 = vmax.f32 %v911, 1e-12
        %v1046 = vmax.f32 %v913, 1e-12
        %v1047 = vmax.f32 %v915, 1e-12
        %v1048 = vmax.f32 %v917, 1e-12
        %v1049 = vmax.f32 %v919, 1e-12
        %v1050 = vmax.f32 %v921, 1e-12
        %v1051 = vmax.f32 %v923, 1e-12
        %v1052 = vrsqrt.pop %v924
        %v1053 = vrsqrt.pop %v925
        %v1054 = vrsqrt.pop %v926
        %v1055 = vrsqrt.pop %v927
        %v1056 = vrsqrt.pop %v928
        %v1057 = vrsqrt.pop %v929
        %v1058 = vrsqrt.pop %v930
        %v1059 = vrsqrt.pop %v931
        %v1060 = vrsqrt.pop %v932
        %v1061 = vrsqrt.pop %v933
        %v1062 = vrsqrt.pop %v934
        %v1063 = vrsqrt.pop %v935
        %v1064 = vrsqrt.pop %v936
        %v1065 = vrsqrt.pop %v937
        %v1066 = vrsqrt.pop %v938
        %v1067 = vrsqrt.pop %v939
        %v1068 = vrsqrt.pop %v940
        %v1069 = vrsqrt.pop %v941
        %v1070 = vrsqrt.pop %v942
        %v1071 = vrsqrt.pop %v943
        %v1072 = vrsqrt.pop %v944
        %v1073 = vrsqrt.pop %v945
        %v1074 = vrsqrt.pop %v946
        %v1075 = vrsqrt.pop %v947
        %v1076 = vrsqrt.pop %v948
        %v1077 = vrsqrt.pop %v949
        %v1078 = vrsqrt.pop %v950
        %v1079 = vrsqrt.pop %v951
        %v1080 = vrsqrt.pop %v952
        %v1081 = vrsqrt.pop %v953
        %v1082 = vrsqrt.pop %v954
        %v1083 = vrsqrt.pop %v955
        %v1084 = vrsqrt.pop %v956
        %v1085 = vrsqrt.pop %v957
        %v1086 = vrsqrt.pop %v958
        %v1087 = vrsqrt.pop %v959
        %v1088 = vrsqrt.pop %v960
        %v1089 = vrsqrt.pop %v961
        %v1090 = vrsqrt.pop %v962
        %v1091 = vrsqrt.pop %v963
        %v1092 = vrsqrt.pop %v964
        %v1093 = vrsqrt.pop %v965
        %v1094 = vrsqrt.pop %v966
        %v1095 = vrsqrt.pop %v967
        %v1096 = vrsqrt.pop %v968
        %v1097 = vrsqrt.pop %v969
        %v1098 = vrsqrt.pop %v970
        %v1099 = vrsqrt.pop %v971
        %v1100 = vrsqrt.pop %v972
        %v1101 = vrsqrt.pop %v973
        %v1102 = vrsqrt.pop %v974
        %v1103 = vrsqrt.pop %v975
        %v1104 = vrsqrt.pop %v976
        %v1105 = vrsqrt.pop %v977
        %v1106 = vrsqrt.pop %v978
        %v1107 = vrsqrt.pop %v979
        %v1108 = vrsqrt.pop %v980
        %v1109 = vrsqrt.pop %v981
        %v1110 = vrsqrt.pop %v982
        %v1111 = vrsqrt.pop %v983
        %v1112 = vrsqrt.pop %v984
        %v1113 = vrsqrt.pop %v985
        %v1114 = vrsqrt.pop %v986
        %v1115 = vrsqrt.pop %v987
        %v1116 = vrsqrt.pop %v988
        %v1117 = vrsqrt.pop %v989
        %v1118 = vrsqrt.pop %v990
        %v1119 = vrsqrt.pop %v991
        %v1120 = vrsqrt.pop %v992
        %v1121 = vrsqrt.pop %v993
        %v1122 = vrsqrt.pop %v994
        %v1123 = vrsqrt.pop %v995
        %v1124 = vrsqrt.pop %v996
        %v1125 = vrsqrt.pop %v997
        %v1126 = vrsqrt.pop %v998
        %v1127 = vrsqrt.pop %v999
        %v1128 = vrsqrt.pop %v1000
        %v1129 = vrsqrt.pop %v1001
        %v1130 = vrsqrt.pop %v1002
        %v1131 = vrsqrt.pop %v1003
        %v1132 = vrsqrt.pop %v1004
        %v1133 = vrsqrt.pop %v1005
        %v1134 = vrsqrt.pop %v1006
        %v1135 = vrsqrt.pop %v1007
        %v1136 = vrsqrt.pop %v1008
        %v1137 = vrsqrt.pop %v1009
        %v1138 = vrsqrt.pop %v1010
        %v1139 = vrsqrt.pop %v1011
        %v1140 = vrsqrt.pop %v1012
        %v1141 = vrsqrt.pop %v1013
        %v1142 = vrsqrt.pop %v1014
        %v1143 = vrsqrt.pop %v1015
        %v1144 = vrsqrt.pop %v1016
        %v1145 = vrsqrt.pop %v1017
        %v1146 = vrsqrt.pop %v1018
        %v1147 = vrsqrt.pop %v1019
        %v1148 = vrsqrt.pop %v1020
        %v1149 = vrsqrt.pop %v1021
        %v1150 = vrsqrt.pop %v1022
        %v1151 = vrsqrt.pop %v1023
        %v1152 = vrsqrt.pop %v1024
        %v1153 = vrsqrt.pop %v1025
        %v1154 = vrsqrt.pop %v1026
        %v1155 = vrsqrt.pop %v1027
        %v1156 = vrsqrt.pop %v1028
        %v1157 = vrsqrt.pop %v1029
        %v1158 = vrsqrt.pop %v1030
        %v1159 = vrsqrt.pop %v1031
        %v1160 = vrsqrt.pop %v1032
        %v1161 = vrsqrt.pop %v1033
        %v1162 = vrsqrt.pop %v1034
        %v1163 = vrsqrt.pop %v1035
        %v1164 = vrsqrt.pop %v1036
        %v1165 = vrsqrt.pop %v1037
        %v1166 = vrsqrt.pop %v1038
        %v1167 = vrsqrt.pop %v1039
        %v1168 = vrsqrt.pop %v1040
        %v1169 = vrsqrt.pop %v1041
        %v1170 = vrsqrt.pop %v1042
        %v1171 = vrsqrt.pop %v1043
        %v1172 = vrsqrt.pop %v1044
        %v1173 = vrsqrt.pop %v1045
        %v1174 = vrsqrt.pop %v1046
        %v1175 = vrsqrt.pop %v1047
        %v1176 = vrsqrt.pop %v1048
        %v1177 = vrsqrt.pop %v1049
        %v1178 = vrsqrt.pop %v1050
        %v1179 = vrsqrt.pop %v1051
        %v1180 = vpack.c.bf16 %v1053, %v1052
        %v1181 = vpack.c.bf16 %v1055, %v1054
        %v1182 = vpack.c.bf16 %v1057, %v1056
        %v1183 = vpack.c.bf16 %v1059, %v1058
        %v1184 = vpack.c.bf16 %v1061, %v1060
        %v1185 = vpack.c.bf16 %v1063, %v1062
        %v1186 = vpack.c.bf16 %v1065, %v1064
        %v1187 = vpack.c.bf16 %v1067, %v1066
        %v1188 = vpack.c.bf16 %v1069, %v1068
        %v1189 = vpack.c.bf16 %v1071, %v1070
        %v1190 = vpack.c.bf16 %v1073, %v1072
        %v1191 = vpack.c.bf16 %v1075, %v1074
        %v1192 = vpack.c.bf16 %v1077, %v1076
        %v1193 = vpack.c.bf16 %v1079, %v1078
        %v1194 = vpack.c.bf16 %v1081, %v1080
        %v1195 = vpack.c.bf16 %v1083, %v1082
        %v1196 = vpack.c.bf16 %v1085, %v1084
        %v1197 = vpack.c.bf16 %v1087, %v1086
        %v1198 = vpack.c.bf16 %v1089, %v1088
        %v1199 = vpack.c.bf16 %v1091, %v1090
        %v1200 = vpack.c.bf16 %v1093, %v1092
        %v1201 = vpack.c.bf16 %v1095, %v1094
        %v1202 = vpack.c.bf16 %v1097, %v1096
        %v1203 = vpack.c.bf16 %v1099, %v1098
        %v1204 = vpack.c.bf16 %v1101, %v1100
        %v1205 = vpack.c.bf16 %v1103, %v1102
        %v1206 = vpack.c.bf16 %v1105, %v1104
        %v1207 = vpack.c.bf16 %v1107, %v1106
        %v1208 = vpack.c.bf16 %v1109, %v1108
        %v1209 = vpack.c.bf16 %v1111, %v1110
        %v1210 = vpack.c.bf16 %v1113, %v1112
        %v1211 = vpack.c.bf16 %v1115, %v1114
        %v1212 = vpack.c.bf16 %v1117, %v1116
        %v1213 = vpack.c.bf16 %v1119, %v1118
        %v1214 = vpack.c.bf16 %v1121, %v1120
        %v1215 = vpack.c.bf16 %v1123, %v1122
        %v1216 = vpack.c.bf16 %v1125, %v1124
        %v1217 = vpack.c.bf16 %v1127, %v1126
        %v1218 = vpack.c.bf16 %v1129, %v1128
        %v1219 = vpack.c.bf16 %v1131, %v1130
        %v1220 = vpack.c.bf16 %v1133, %v1132
        %v1221 = vpack.c.bf16 %v1135, %v1134
        %v1222 = vpack.c.bf16 %v1137, %v1136
        %v1223 = vpack.c.bf16 %v1139, %v1138
        %v1224 = vpack.c.bf16 %v1141, %v1140
        %v1225 = vpack.c.bf16 %v1143, %v1142
        %v1226 = vpack.c.bf16 %v1145, %v1144
        %v1227 = vpack.c.bf16 %v1147, %v1146
        %v1228 = vpack.c.bf16 %v1149, %v1148
        %v1229 = vpack.c.bf16 %v1151, %v1150
        %v1230 = vpack.c.bf16 %v1153, %v1152
        %v1231 = vpack.c.bf16 %v1155, %v1154
        %v1232 = vpack.c.bf16 %v1157, %v1156
        %v1233 = vpack.c.bf16 %v1159, %v1158
        %v1234 = vpack.c.bf16 %v1161, %v1160
        %v1235 = vpack.c.bf16 %v1163, %v1162
        %v1236 = vpack.c.bf16 %v1165, %v1164
        %v1237 = vpack.c.bf16 %v1167, %v1166
        %v1238 = vpack.c.bf16 %v1169, %v1168
        %v1239 = vpack.c.bf16 %v1171, %v1170
        %v1240 = vpack.c.bf16 %v1173, %v1172
        %v1241 = vpack.c.bf16 %v1175, %v1174
        %v1242 = vpack.c.bf16 %v1177, %v1176
        %v1243 = vpack.c.bf16 %v1179, %v1178
        %v1309 = vunpack.c.l.s4 839922192
        %v1310 = vunpack.c.0.s8 %v1309
        %v1311 = vlaneseq
        %v1312 = vshrl.u32 %v1311, 7
        %v1313 = vsub.s32 %v1310, %v1312
        %v1314 = vrot.slane %v1180, %v1313
        %v1316 = vunpack.c.l.s4 1985246804
        %v1317 = vunpack.c.0.s8 %v1316
        %v1318 = vlaneseq
        %v1319 = vshrl.u32 %v1318, 7
        %v1320 = vsub.s32 %v1317, %v1319
        %v1321 = vrot.slane %v1180, %v1320
        %v1323 = vunpack.c.l.s4 839922192
        %v1324 = vunpack.c.0.s8 %v1323
        %v1325 = vlaneseq
        %v1326 = vshrl.u32 %v1325, 7
        %v1327 = vsub.s32 %v1324, %v1326
        %v1328 = vrot.slane %v1181, %v1327
        %v1330 = vunpack.c.l.s4 1985246804
        %v1331 = vunpack.c.0.s8 %v1330
        %v1332 = vlaneseq
        %v1333 = vshrl.u32 %v1332, 7
        %v1334 = vsub.s32 %v1331, %v1333
        %v1335 = vrot.slane %v1181, %v1334
        %v1337 = vunpack.c.l.s4 839922192
        %v1338 = vunpack.c.0.s8 %v1337
        %v1339 = vlaneseq
        %v1340 = vshrl.u32 %v1339, 7
        %v1341 = vsub.s32 %v1338, %v1340
        %v1342 = vrot.slane %v1182, %v1341
        %v1344 = vunpack.c.l.s4 1985246804
        %v1345 = vunpack.c.0.s8 %v1344
        %v1346 = vlaneseq
        %v1347 = vshrl.u32 %v1346, 7
        %v1348 = vsub.s32 %v1345, %v1347
        %v1349 = vrot.slane %v1182, %v1348
        %v1351 = vunpack.c.l.s4 839922192
        %v1352 = vunpack.c.0.s8 %v1351
        %v1353 = vlaneseq
        %v1354 = vshrl.u32 %v1353, 7
        %v1355 = vsub.s32 %v1352, %v1354
        %v1356 = vrot.slane %v1183, %v1355
        %v1358 = vunpack.c.l.s4 1985246804
        %v1359 = vunpack.c.0.s8 %v1358
        %v1360 = vlaneseq
        %v1361 = vshrl.u32 %v1360, 7
        %v1362 = vsub.s32 %v1359, %v1361
        %v1363 = vrot.slane %v1183, %v1362
        %v1365 = vunpack.c.l.s4 839922192
        %v1366 = vunpack.c.0.s8 %v1365
        %v1367 = vlaneseq
        %v1368 = vshrl.u32 %v1367, 7
        %v1369 = vsub.s32 %v1366, %v1368
        %v1370 = vrot.slane %v1184, %v1369
        %v1372 = vunpack.c.l.s4 1985246804
        %v1373 = vunpack.c.0.s8 %v1372
        %v1374 = vlaneseq
        %v1375 = vshrl.u32 %v1374, 7
        %v1376 = vsub.s32 %v1373, %v1375
        %v1377 = vrot.slane %v1184, %v1376
        %v1379 = vunpack.c.l.s4 839922192
        %v1380 = vunpack.c.0.s8 %v1379
        %v1381 = vlaneseq
        %v1382 = vshrl.u32 %v1381, 7
        %v1383 = vsub.s32 %v1380, %v1382
        %v1384 = vrot.slane %v1185, %v1383
        %v1386 = vunpack.c.l.s4 1985246804
        %v1387 = vunpack.c.0.s8 %v1386
        %v1388 = vlaneseq
        %v1389 = vshrl.u32 %v1388, 7
        %v1390 = vsub.s32 %v1387, %v1389
        %v1391 = vrot.slane %v1185, %v1390
        %v1393 = vunpack.c.l.s4 839922192
        %v1394 = vunpack.c.0.s8 %v1393
        %v1395 = vlaneseq
        %v1396 = vshrl.u32 %v1395, 7
        %v1397 = vsub.s32 %v1394, %v1396
        %v1398 = vrot.slane %v1186, %v1397
        %v1400 = vunpack.c.l.s4 1985246804
        %v1401 = vunpack.c.0.s8 %v1400
        %v1402 = vlaneseq
        %v1403 = vshrl.u32 %v1402, 7
        %v1404 = vsub.s32 %v1401, %v1403
        %v1405 = vrot.slane %v1186, %v1404
        %v1407 = vunpack.c.l.s4 839922192
        %v1408 = vunpack.c.0.s8 %v1407
        %v1409 = vlaneseq
        %v1410 = vshrl.u32 %v1409, 7
        %v1411 = vsub.s32 %v1408, %v1410
        %v1412 = vrot.slane %v1187, %v1411
        %v1414 = vunpack.c.l.s4 1985246804
        %v1415 = vunpack.c.0.s8 %v1414
        %v1416 = vlaneseq
        %v1417 = vshrl.u32 %v1416, 7
        %v1418 = vsub.s32 %v1415, %v1417
        %v1419 = vrot.slane %v1187, %v1418
        %v1421 = vunpack.c.l.s4 839922192
        %v1422 = vunpack.c.0.s8 %v1421
        %v1423 = vlaneseq
        %v1424 = vshrl.u32 %v1423, 7
        %v1425 = vsub.s32 %v1422, %v1424
        %v1426 = vrot.slane %v1188, %v1425
        %v1428 = vunpack.c.l.s4 1985246804
        %v1429 = vunpack.c.0.s8 %v1428
        %v1430 = vlaneseq
        %v1431 = vshrl.u32 %v1430, 7
        %v1432 = vsub.s32 %v1429, %v1431
        %v1433 = vrot.slane %v1188, %v1432
        %v1435 = vunpack.c.l.s4 839922192
        %v1436 = vunpack.c.0.s8 %v1435
        %v1437 = vlaneseq
        %v1438 = vshrl.u32 %v1437, 7
        %v1439 = vsub.s32 %v1436, %v1438
        %v1440 = vrot.slane %v1189, %v1439
        %v1442 = vunpack.c.l.s4 1985246804
        %v1443 = vunpack.c.0.s8 %v1442
        %v1444 = vlaneseq
        %v1445 = vshrl.u32 %v1444, 7
        %v1446 = vsub.s32 %v1443, %v1445
        %v1447 = vrot.slane %v1189, %v1446
        %v1449 = vunpack.c.l.s4 839922192
        %v1450 = vunpack.c.0.s8 %v1449
        %v1451 = vlaneseq
        %v1452 = vshrl.u32 %v1451, 7
        %v1453 = vsub.s32 %v1450, %v1452
        %v1454 = vrot.slane %v1190, %v1453
        %v1456 = vunpack.c.l.s4 1985246804
        %v1457 = vunpack.c.0.s8 %v1456
        %v1458 = vlaneseq
        %v1459 = vshrl.u32 %v1458, 7
        %v1460 = vsub.s32 %v1457, %v1459
        %v1461 = vrot.slane %v1190, %v1460
        %v1463 = vunpack.c.l.s4 839922192
        %v1464 = vunpack.c.0.s8 %v1463
        %v1465 = vlaneseq
        %v1466 = vshrl.u32 %v1465, 7
        %v1467 = vsub.s32 %v1464, %v1466
        %v1468 = vrot.slane %v1191, %v1467
        %v1470 = vunpack.c.l.s4 1985246804
        %v1471 = vunpack.c.0.s8 %v1470
        %v1472 = vlaneseq
        %v1473 = vshrl.u32 %v1472, 7
        %v1474 = vsub.s32 %v1471, %v1473
        %v1475 = vrot.slane %v1191, %v1474
        %v1477 = vunpack.c.l.s4 839922192
        %v1478 = vunpack.c.0.s8 %v1477
        %v1479 = vlaneseq
        %v1480 = vshrl.u32 %v1479, 7
        %v1481 = vsub.s32 %v1478, %v1480
        %v1482 = vrot.slane %v1192, %v1481
        %v1484 = vunpack.c.l.s4 1985246804
        %v1485 = vunpack.c.0.s8 %v1484
        %v1486 = vlaneseq
        %v1487 = vshrl.u32 %v1486, 7
        %v1488 = vsub.s32 %v1485, %v1487
        %v1489 = vrot.slane %v1192, %v1488
        %v1491 = vunpack.c.l.s4 839922192
        %v1492 = vunpack.c.0.s8 %v1491
        %v1493 = vlaneseq
        %v1494 = vshrl.u32 %v1493, 7
        %v1495 = vsub.s32 %v1492, %v1494
        %v1496 = vrot.slane %v1193, %v1495
        %v1498 = vunpack.c.l.s4 1985246804
        %v1499 = vunpack.c.0.s8 %v1498
        %v1500 = vlaneseq
        %v1501 = vshrl.u32 %v1500, 7
        %v1502 = vsub.s32 %v1499, %v1501
        %v1503 = vrot.slane %v1193, %v1502
        %v1505 = vunpack.c.l.s4 839922192
        %v1506 = vunpack.c.0.s8 %v1505
        %v1507 = vlaneseq
        %v1508 = vshrl.u32 %v1507, 7
        %v1509 = vsub.s32 %v1506, %v1508
        %v1510 = vrot.slane %v1194, %v1509
        %v1512 = vunpack.c.l.s4 1985246804
        %v1513 = vunpack.c.0.s8 %v1512
        %v1514 = vlaneseq
        %v1515 = vshrl.u32 %v1514, 7
        %v1516 = vsub.s32 %v1513, %v1515
        %v1517 = vrot.slane %v1194, %v1516
        %v1519 = vunpack.c.l.s4 839922192
        %v1520 = vunpack.c.0.s8 %v1519
        %v1521 = vlaneseq
        %v1522 = vshrl.u32 %v1521, 7
        %v1523 = vsub.s32 %v1520, %v1522
        %v1524 = vrot.slane %v1195, %v1523
        %v1526 = vunpack.c.l.s4 1985246804
        %v1527 = vunpack.c.0.s8 %v1526
        %v1528 = vlaneseq
        %v1529 = vshrl.u32 %v1528, 7
        %v1530 = vsub.s32 %v1527, %v1529
        %v1531 = vrot.slane %v1195, %v1530
        %v1533 = vunpack.c.l.s4 839922192
        %v1534 = vunpack.c.0.s8 %v1533
        %v1535 = vlaneseq
        %v1536 = vshrl.u32 %v1535, 7
        %v1537 = vsub.s32 %v1534, %v1536
        %v1538 = vrot.slane %v1196, %v1537
        %v1540 = vunpack.c.l.s4 1985246804
        %v1541 = vunpack.c.0.s8 %v1540
        %v1542 = vlaneseq
        %v1543 = vshrl.u32 %v1542, 7
        %v1544 = vsub.s32 %v1541, %v1543
        %v1545 = vrot.slane %v1196, %v1544
        %v1547 = vunpack.c.l.s4 839922192
        %v1548 = vunpack.c.0.s8 %v1547
        %v1549 = vlaneseq
        %v1550 = vshrl.u32 %v1549, 7
        %v1551 = vsub.s32 %v1548, %v1550
        %v1552 = vrot.slane %v1197, %v1551
        %v1554 = vunpack.c.l.s4 1985246804
        %v1555 = vunpack.c.0.s8 %v1554
        %v1556 = vlaneseq
        %v1557 = vshrl.u32 %v1556, 7
        %v1558 = vsub.s32 %v1555, %v1557
        %v1559 = vrot.slane %v1197, %v1558
        %v1561 = vunpack.c.l.s4 839922192
        %v1562 = vunpack.c.0.s8 %v1561
        %v1563 = vlaneseq
        %v1564 = vshrl.u32 %v1563, 7
        %v1565 = vsub.s32 %v1562, %v1564
        %v1566 = vrot.slane %v1198, %v1565
        %v1568 = vunpack.c.l.s4 1985246804
        %v1569 = vunpack.c.0.s8 %v1568
        %v1570 = vlaneseq
        %v1571 = vshrl.u32 %v1570, 7
        %v1572 = vsub.s32 %v1569, %v1571
        %v1573 = vrot.slane %v1198, %v1572
        %v1575 = vunpack.c.l.s4 839922192
        %v1576 = vunpack.c.0.s8 %v1575
        %v1577 = vlaneseq
        %v1578 = vshrl.u32 %v1577, 7
        %v1579 = vsub.s32 %v1576, %v1578
        %v1580 = vrot.slane %v1199, %v1579
        %v1582 = vunpack.c.l.s4 1985246804
        %v1583 = vunpack.c.0.s8 %v1582
        %v1584 = vlaneseq
        %v1585 = vshrl.u32 %v1584, 7
        %v1586 = vsub.s32 %v1583, %v1585
        %v1587 = vrot.slane %v1199, %v1586
        %v1589 = vunpack.c.l.s4 839922192
        %v1590 = vunpack.c.0.s8 %v1589
        %v1591 = vlaneseq
        %v1592 = vshrl.u32 %v1591, 7
        %v1593 = vsub.s32 %v1590, %v1592
        %v1594 = vrot.slane %v1200, %v1593
        %v1596 = vunpack.c.l.s4 1985246804
        %v1597 = vunpack.c.0.s8 %v1596
        %v1598 = vlaneseq
        %v1599 = vshrl.u32 %v1598, 7
        %v1600 = vsub.s32 %v1597, %v1599
        %v1601 = vrot.slane %v1200, %v1600
        %v1603 = vunpack.c.l.s4 839922192
        %v1604 = vunpack.c.0.s8 %v1603
        %v1605 = vlaneseq
        %v1606 = vshrl.u32 %v1605, 7
        %v1607 = vsub.s32 %v1604, %v1606
        %v1608 = vrot.slane %v1201, %v1607
        %v1610 = vunpack.c.l.s4 1985246804
        %v1611 = vunpack.c.0.s8 %v1610
        %v1612 = vlaneseq
        %v1613 = vshrl.u32 %v1612, 7
        %v1614 = vsub.s32 %v1611, %v1613
        %v1615 = vrot.slane %v1201, %v1614
        %v1617 = vunpack.c.l.s4 839922192
        %v1618 = vunpack.c.0.s8 %v1617
        %v1619 = vlaneseq
        %v1620 = vshrl.u32 %v1619, 7
        %v1621 = vsub.s32 %v1618, %v1620
        %v1622 = vrot.slane %v1202, %v1621
        %v1624 = vunpack.c.l.s4 1985246804
        %v1625 = vunpack.c.0.s8 %v1624
        %v1626 = vlaneseq
        %v1627 = vshrl.u32 %v1626, 7
        %v1628 = vsub.s32 %v1625, %v1627
        %v1629 = vrot.slane %v1202, %v1628
        %v1631 = vunpack.c.l.s4 839922192
        %v1632 = vunpack.c.0.s8 %v1631
        %v1633 = vlaneseq
        %v1634 = vshrl.u32 %v1633, 7
        %v1635 = vsub.s32 %v1632, %v1634
        %v1636 = vrot.slane %v1203, %v1635
        %v1638 = vunpack.c.l.s4 1985246804
        %v1639 = vunpack.c.0.s8 %v1638
        %v1640 = vlaneseq
        %v1641 = vshrl.u32 %v1640, 7
        %v1642 = vsub.s32 %v1639, %v1641
        %v1643 = vrot.slane %v1203, %v1642
        %v1645 = vunpack.c.l.s4 839922192
        %v1646 = vunpack.c.0.s8 %v1645
        %v1647 = vlaneseq
        %v1648 = vshrl.u32 %v1647, 7
        %v1649 = vsub.s32 %v1646, %v1648
        %v1650 = vrot.slane %v1204, %v1649
        %v1652 = vunpack.c.l.s4 1985246804
        %v1653 = vunpack.c.0.s8 %v1652
        %v1654 = vlaneseq
        %v1655 = vshrl.u32 %v1654, 7
        %v1656 = vsub.s32 %v1653, %v1655
        %v1657 = vrot.slane %v1204, %v1656
        %v1659 = vunpack.c.l.s4 839922192
        %v1660 = vunpack.c.0.s8 %v1659
        %v1661 = vlaneseq
        %v1662 = vshrl.u32 %v1661, 7
        %v1663 = vsub.s32 %v1660, %v1662
        %v1664 = vrot.slane %v1205, %v1663
        %v1666 = vunpack.c.l.s4 1985246804
        %v1667 = vunpack.c.0.s8 %v1666
        %v1668 = vlaneseq
        %v1669 = vshrl.u32 %v1668, 7
        %v1670 = vsub.s32 %v1667, %v1669
        %v1671 = vrot.slane %v1205, %v1670
        %v1673 = vunpack.c.l.s4 839922192
        %v1674 = vunpack.c.0.s8 %v1673
        %v1675 = vlaneseq
        %v1676 = vshrl.u32 %v1675, 7
        %v1677 = vsub.s32 %v1674, %v1676
        %v1678 = vrot.slane %v1206, %v1677
        %v1680 = vunpack.c.l.s4 1985246804
        %v1681 = vunpack.c.0.s8 %v1680
        %v1682 = vlaneseq
        %v1683 = vshrl.u32 %v1682, 7
        %v1684 = vsub.s32 %v1681, %v1683
        %v1685 = vrot.slane %v1206, %v1684
        %v1687 = vunpack.c.l.s4 839922192
        %v1688 = vunpack.c.0.s8 %v1687
        %v1689 = vlaneseq
        %v1690 = vshrl.u32 %v1689, 7
        %v1691 = vsub.s32 %v1688, %v1690
        %v1692 = vrot.slane %v1207, %v1691
        %v1694 = vunpack.c.l.s4 1985246804
        %v1695 = vunpack.c.0.s8 %v1694
        %v1696 = vlaneseq
        %v1697 = vshrl.u32 %v1696, 7
        %v1698 = vsub.s32 %v1695, %v1697
        %v1699 = vrot.slane %v1207, %v1698
        %v1701 = vunpack.c.l.s4 839922192
        %v1702 = vunpack.c.0.s8 %v1701
        %v1703 = vlaneseq
        %v1704 = vshrl.u32 %v1703, 7
        %v1705 = vsub.s32 %v1702, %v1704
        %v1706 = vrot.slane %v1208, %v1705
        %v1708 = vunpack.c.l.s4 1985246804
        %v1709 = vunpack.c.0.s8 %v1708
        %v1710 = vlaneseq
        %v1711 = vshrl.u32 %v1710, 7
        %v1712 = vsub.s32 %v1709, %v1711
        %v1713 = vrot.slane %v1208, %v1712
        %v1715 = vunpack.c.l.s4 839922192
        %v1716 = vunpack.c.0.s8 %v1715
        %v1717 = vlaneseq
        %v1718 = vshrl.u32 %v1717, 7
        %v1719 = vsub.s32 %v1716, %v1718
        %v1720 = vrot.slane %v1209, %v1719
        %v1722 = vunpack.c.l.s4 1985246804
        %v1723 = vunpack.c.0.s8 %v1722
        %v1724 = vlaneseq
        %v1725 = vshrl.u32 %v1724, 7
        %v1726 = vsub.s32 %v1723, %v1725
        %v1727 = vrot.slane %v1209, %v1726
        %v1729 = vunpack.c.l.s4 839922192
        %v1730 = vunpack.c.0.s8 %v1729
        %v1731 = vlaneseq
        %v1732 = vshrl.u32 %v1731, 7
        %v1733 = vsub.s32 %v1730, %v1732
        %v1734 = vrot.slane %v1210, %v1733
        %v1736 = vunpack.c.l.s4 1985246804
        %v1737 = vunpack.c.0.s8 %v1736
        %v1738 = vlaneseq
        %v1739 = vshrl.u32 %v1738, 7
        %v1740 = vsub.s32 %v1737, %v1739
        %v1741 = vrot.slane %v1210, %v1740
        %v1743 = vunpack.c.l.s4 839922192
        %v1744 = vunpack.c.0.s8 %v1743
        %v1745 = vlaneseq
        %v1746 = vshrl.u32 %v1745, 7
        %v1747 = vsub.s32 %v1744, %v1746
        %v1748 = vrot.slane %v1211, %v1747
        %v1750 = vunpack.c.l.s4 1985246804
        %v1751 = vunpack.c.0.s8 %v1750
        %v1752 = vlaneseq
        %v1753 = vshrl.u32 %v1752, 7
        %v1754 = vsub.s32 %v1751, %v1753
        %v1755 = vrot.slane %v1211, %v1754
        %v1757 = vunpack.c.l.s4 839922192
        %v1758 = vunpack.c.0.s8 %v1757
        %v1759 = vlaneseq
        %v1760 = vshrl.u32 %v1759, 7
        %v1761 = vsub.s32 %v1758, %v1760
        %v1762 = vrot.slane %v1212, %v1761
        %v1764 = vunpack.c.l.s4 1985246804
        %v1765 = vunpack.c.0.s8 %v1764
        %v1766 = vlaneseq
        %v1767 = vshrl.u32 %v1766, 7
        %v1768 = vsub.s32 %v1765, %v1767
        %v1769 = vrot.slane %v1212, %v1768
        %v1771 = vunpack.c.l.s4 839922192
        %v1772 = vunpack.c.0.s8 %v1771
        %v1773 = vlaneseq
        %v1774 = vshrl.u32 %v1773, 7
        %v1775 = vsub.s32 %v1772, %v1774
        %v1776 = vrot.slane %v1213, %v1775
        %v1778 = vunpack.c.l.s4 1985246804
        %v1779 = vunpack.c.0.s8 %v1778
        %v1780 = vlaneseq
        %v1781 = vshrl.u32 %v1780, 7
        %v1782 = vsub.s32 %v1779, %v1781
        %v1783 = vrot.slane %v1213, %v1782
        %v1785 = vunpack.c.l.s4 839922192
        %v1786 = vunpack.c.0.s8 %v1785
        %v1787 = vlaneseq
        %v1788 = vshrl.u32 %v1787, 7
        %v1789 = vsub.s32 %v1786, %v1788
        %v1790 = vrot.slane %v1214, %v1789
        %v1792 = vunpack.c.l.s4 1985246804
        %v1793 = vunpack.c.0.s8 %v1792
        %v1794 = vlaneseq
        %v1795 = vshrl.u32 %v1794, 7
        %v1796 = vsub.s32 %v1793, %v1795
        %v1797 = vrot.slane %v1214, %v1796
        %v1799 = vunpack.c.l.s4 839922192
        %v1800 = vunpack.c.0.s8 %v1799
        %v1801 = vlaneseq
        %v1802 = vshrl.u32 %v1801, 7
        %v1803 = vsub.s32 %v1800, %v1802
        %v1804 = vrot.slane %v1215, %v1803
        %v1806 = vunpack.c.l.s4 1985246804
        %v1807 = vunpack.c.0.s8 %v1806
        %v1808 = vlaneseq
        %v1809 = vshrl.u32 %v1808, 7
        %v1810 = vsub.s32 %v1807, %v1809
        %v1811 = vrot.slane %v1215, %v1810
        %v1813 = vunpack.c.l.s4 839922192
        %v1814 = vunpack.c.0.s8 %v1813
        %v1815 = vlaneseq
        %v1816 = vshrl.u32 %v1815, 7
        %v1817 = vsub.s32 %v1814, %v1816
        %v1818 = vrot.slane %v1216, %v1817
        %v1820 = vunpack.c.l.s4 1985246804
        %v1821 = vunpack.c.0.s8 %v1820
        %v1822 = vlaneseq
        %v1823 = vshrl.u32 %v1822, 7
        %v1824 = vsub.s32 %v1821, %v1823
        %v1825 = vrot.slane %v1216, %v1824
        %v1827 = vunpack.c.l.s4 839922192
        %v1828 = vunpack.c.0.s8 %v1827
        %v1829 = vlaneseq
        %v1830 = vshrl.u32 %v1829, 7
        %v1831 = vsub.s32 %v1828, %v1830
        %v1832 = vrot.slane %v1217, %v1831
        %v1834 = vunpack.c.l.s4 1985246804
        %v1835 = vunpack.c.0.s8 %v1834
        %v1836 = vlaneseq
        %v1837 = vshrl.u32 %v1836, 7
        %v1838 = vsub.s32 %v1835, %v1837
        %v1839 = vrot.slane %v1217, %v1838
        %v1841 = vunpack.c.l.s4 839922192
        %v1842 = vunpack.c.0.s8 %v1841
        %v1843 = vlaneseq
        %v1844 = vshrl.u32 %v1843, 7
        %v1845 = vsub.s32 %v1842, %v1844
        %v1846 = vrot.slane %v1218, %v1845
        %v1848 = vunpack.c.l.s4 1985246804
        %v1849 = vunpack.c.0.s8 %v1848
        %v1850 = vlaneseq
        %v1851 = vshrl.u32 %v1850, 7
        %v1852 = vsub.s32 %v1849, %v1851
        %v1853 = vrot.slane %v1218, %v1852
        %v1855 = vunpack.c.l.s4 839922192
        %v1856 = vunpack.c.0.s8 %v1855
        %v1857 = vlaneseq
        %v1858 = vshrl.u32 %v1857, 7
        %v1859 = vsub.s32 %v1856, %v1858
        %v1860 = vrot.slane %v1219, %v1859
        %v1862 = vunpack.c.l.s4 1985246804
        %v1863 = vunpack.c.0.s8 %v1862
        %v1864 = vlaneseq
        %v1865 = vshrl.u32 %v1864, 7
        %v1866 = vsub.s32 %v1863, %v1865
        %v1867 = vrot.slane %v1219, %v1866
        %v1869 = vunpack.c.l.s4 839922192
        %v1870 = vunpack.c.0.s8 %v1869
        %v1871 = vlaneseq
        %v1872 = vshrl.u32 %v1871, 7
        %v1873 = vsub.s32 %v1870, %v1872
        %v1874 = vrot.slane %v1220, %v1873
        %v1876 = vunpack.c.l.s4 1985246804
        %v1877 = vunpack.c.0.s8 %v1876
        %v1878 = vlaneseq
        %v1879 = vshrl.u32 %v1878, 7
        %v1880 = vsub.s32 %v1877, %v1879
        %v1881 = vrot.slane %v1220, %v1880
        %v1883 = vunpack.c.l.s4 839922192
        %v1884 = vunpack.c.0.s8 %v1883
        %v1885 = vlaneseq
        %v1886 = vshrl.u32 %v1885, 7
        %v1887 = vsub.s32 %v1884, %v1886
        %v1888 = vrot.slane %v1221, %v1887
        %v1890 = vunpack.c.l.s4 1985246804
        %v1891 = vunpack.c.0.s8 %v1890
        %v1892 = vlaneseq
        %v1893 = vshrl.u32 %v1892, 7
        %v1894 = vsub.s32 %v1891, %v1893
        %v1895 = vrot.slane %v1221, %v1894
        %v1897 = vunpack.c.l.s4 839922192
        %v1898 = vunpack.c.0.s8 %v1897
        %v1899 = vlaneseq
        %v1900 = vshrl.u32 %v1899, 7
        %v1901 = vsub.s32 %v1898, %v1900
        %v1902 = vrot.slane %v1222, %v1901
        %v1904 = vunpack.c.l.s4 1985246804
        %v1905 = vunpack.c.0.s8 %v1904
        %v1906 = vlaneseq
        %v1907 = vshrl.u32 %v1906, 7
        %v1908 = vsub.s32 %v1905, %v1907
        %v1909 = vrot.slane %v1222, %v1908
        %v1911 = vunpack.c.l.s4 839922192
        %v1912 = vunpack.c.0.s8 %v1911
        %v1913 = vlaneseq
        %v1914 = vshrl.u32 %v1913, 7
        %v1915 = vsub.s32 %v1912, %v1914
        %v1916 = vrot.slane %v1223, %v1915
        %v1918 = vunpack.c.l.s4 1985246804
        %v1919 = vunpack.c.0.s8 %v1918
        %v1920 = vlaneseq
        %v1921 = vshrl.u32 %v1920, 7
        %v1922 = vsub.s32 %v1919, %v1921
        %v1923 = vrot.slane %v1223, %v1922
        %v1925 = vunpack.c.l.s4 839922192
        %v1926 = vunpack.c.0.s8 %v1925
        %v1927 = vlaneseq
        %v1928 = vshrl.u32 %v1927, 7
        %v1929 = vsub.s32 %v1926, %v1928
        %v1930 = vrot.slane %v1224, %v1929
        %v1932 = vunpack.c.l.s4 1985246804
        %v1933 = vunpack.c.0.s8 %v1932
        %v1934 = vlaneseq
        %v1935 = vshrl.u32 %v1934, 7
        %v1936 = vsub.s32 %v1933, %v1935
        %v1937 = vrot.slane %v1224, %v1936
        %v1939 = vunpack.c.l.s4 839922192
        %v1940 = vunpack.c.0.s8 %v1939
        %v1941 = vlaneseq
        %v1942 = vshrl.u32 %v1941, 7
        %v1943 = vsub.s32 %v1940, %v1942
        %v1944 = vrot.slane %v1225, %v1943
        %v1946 = vunpack.c.l.s4 1985246804
        %v1947 = vunpack.c.0.s8 %v1946
        %v1948 = vlaneseq
        %v1949 = vshrl.u32 %v1948, 7
        %v1950 = vsub.s32 %v1947, %v1949
        %v1951 = vrot.slane %v1225, %v1950
        %v1953 = vunpack.c.l.s4 839922192
        %v1954 = vunpack.c.0.s8 %v1953
        %v1955 = vlaneseq
        %v1956 = vshrl.u32 %v1955, 7
        %v1957 = vsub.s32 %v1954, %v1956
        %v1958 = vrot.slane %v1226, %v1957
        %v1960 = vunpack.c.l.s4 1985246804
        %v1961 = vunpack.c.0.s8 %v1960
        %v1962 = vlaneseq
        %v1963 = vshrl.u32 %v1962, 7
        %v1964 = vsub.s32 %v1961, %v1963
        %v1965 = vrot.slane %v1226, %v1964
        %v1967 = vunpack.c.l.s4 839922192
        %v1968 = vunpack.c.0.s8 %v1967
        %v1969 = vlaneseq
        %v1970 = vshrl.u32 %v1969, 7
        %v1971 = vsub.s32 %v1968, %v1970
        %v1972 = vrot.slane %v1227, %v1971
        %v1974 = vunpack.c.l.s4 1985246804
        %v1975 = vunpack.c.0.s8 %v1974
        %v1976 = vlaneseq
        %v1977 = vshrl.u32 %v1976, 7
        %v1978 = vsub.s32 %v1975, %v1977
        %v1979 = vrot.slane %v1227, %v1978
        %v1981 = vunpack.c.l.s4 839922192
        %v1982 = vunpack.c.0.s8 %v1981
        %v1983 = vlaneseq
        %v1984 = vshrl.u32 %v1983, 7
        %v1985 = vsub.s32 %v1982, %v1984
        %v1986 = vrot.slane %v1228, %v1985
        %v1988 = vunpack.c.l.s4 1985246804
        %v1989 = vunpack.c.0.s8 %v1988
        %v1990 = vlaneseq
        %v1991 = vshrl.u32 %v1990, 7
        %v1992 = vsub.s32 %v1989, %v1991
        %v1993 = vrot.slane %v1228, %v1992
        %v1995 = vunpack.c.l.s4 839922192
        %v1996 = vunpack.c.0.s8 %v1995
        %v1997 = vlaneseq
        %v1998 = vshrl.u32 %v1997, 7
        %v1999 = vsub.s32 %v1996, %v1998
        %v2000 = vrot.slane %v1229, %v1999
        %v2002 = vunpack.c.l.s4 1985246804
        %v2003 = vunpack.c.0.s8 %v2002
        %v2004 = vlaneseq
        %v2005 = vshrl.u32 %v2004, 7
        %v2006 = vsub.s32 %v2003, %v2005
        %v2007 = vrot.slane %v1229, %v2006
        %v2009 = vunpack.c.l.s4 839922192
        %v2010 = vunpack.c.0.s8 %v2009
        %v2011 = vlaneseq
        %v2012 = vshrl.u32 %v2011, 7
        %v2013 = vsub.s32 %v2010, %v2012
        %v2014 = vrot.slane %v1230, %v2013
        %v2016 = vunpack.c.l.s4 1985246804
        %v2017 = vunpack.c.0.s8 %v2016
        %v2018 = vlaneseq
        %v2019 = vshrl.u32 %v2018, 7
        %v2020 = vsub.s32 %v2017, %v2019
        %v2021 = vrot.slane %v1230, %v2020
        %v2023 = vunpack.c.l.s4 839922192
        %v2024 = vunpack.c.0.s8 %v2023
        %v2025 = vlaneseq
        %v2026 = vshrl.u32 %v2025, 7
        %v2027 = vsub.s32 %v2024, %v2026
        %v2028 = vrot.slane %v1231, %v2027
        %v2030 = vunpack.c.l.s4 1985246804
        %v2031 = vunpack.c.0.s8 %v2030
        %v2032 = vlaneseq
        %v2033 = vshrl.u32 %v2032, 7
        %v2034 = vsub.s32 %v2031, %v2033
        %v2035 = vrot.slane %v1231, %v2034
        %v2037 = vunpack.c.l.s4 839922192
        %v2038 = vunpack.c.0.s8 %v2037
        %v2039 = vlaneseq
        %v2040 = vshrl.u32 %v2039, 7
        %v2041 = vsub.s32 %v2038, %v2040
        %v2042 = vrot.slane %v1232, %v2041
        %v2044 = vunpack.c.l.s4 1985246804
        %v2045 = vunpack.c.0.s8 %v2044
        %v2046 = vlaneseq
        %v2047 = vshrl.u32 %v2046, 7
        %v2048 = vsub.s32 %v2045, %v2047
        %v2049 = vrot.slane %v1232, %v2048
        %v2051 = vunpack.c.l.s4 839922192
        %v2052 = vunpack.c.0.s8 %v2051
        %v2053 = vlaneseq
        %v2054 = vshrl.u32 %v2053, 7
        %v2055 = vsub.s32 %v2052, %v2054
        %v2056 = vrot.slane %v1233, %v2055
        %v2058 = vunpack.c.l.s4 1985246804
        %v2059 = vunpack.c.0.s8 %v2058
        %v2060 = vlaneseq
        %v2061 = vshrl.u32 %v2060, 7
        %v2062 = vsub.s32 %v2059, %v2061
        %v2063 = vrot.slane %v1233, %v2062
        %v2065 = vunpack.c.l.s4 839922192
        %v2066 = vunpack.c.0.s8 %v2065
        %v2067 = vlaneseq
        %v2068 = vshrl.u32 %v2067, 7
        %v2069 = vsub.s32 %v2066, %v2068
        %v2070 = vrot.slane %v1234, %v2069
        %v2072 = vunpack.c.l.s4 1985246804
        %v2073 = vunpack.c.0.s8 %v2072
        %v2074 = vlaneseq
        %v2075 = vshrl.u32 %v2074, 7
        %v2076 = vsub.s32 %v2073, %v2075
        %v2077 = vrot.slane %v1234, %v2076
        %v2079 = vunpack.c.l.s4 839922192
        %v2080 = vunpack.c.0.s8 %v2079
        %v2081 = vlaneseq
        %v2082 = vshrl.u32 %v2081, 7
        %v2083 = vsub.s32 %v2080, %v2082
        %v2084 = vrot.slane %v1235, %v2083
        %v2086 = vunpack.c.l.s4 1985246804
        %v2087 = vunpack.c.0.s8 %v2086
        %v2088 = vlaneseq
        %v2089 = vshrl.u32 %v2088, 7
        %v2090 = vsub.s32 %v2087, %v2089
        %v2091 = vrot.slane %v1235, %v2090
        %v2093 = vunpack.c.l.s4 839922192
        %v2094 = vunpack.c.0.s8 %v2093
        %v2095 = vlaneseq
        %v2096 = vshrl.u32 %v2095, 7
        %v2097 = vsub.s32 %v2094, %v2096
        %v2098 = vrot.slane %v1236, %v2097
        %v2100 = vunpack.c.l.s4 1985246804
        %v2101 = vunpack.c.0.s8 %v2100
        %v2102 = vlaneseq
        %v2103 = vshrl.u32 %v2102, 7
        %v2104 = vsub.s32 %v2101, %v2103
        %v2105 = vrot.slane %v1236, %v2104
        %v2107 = vunpack.c.l.s4 839922192
        %v2108 = vunpack.c.0.s8 %v2107
        %v2109 = vlaneseq
        %v2110 = vshrl.u32 %v2109, 7
        %v2111 = vsub.s32 %v2108, %v2110
        %v2112 = vrot.slane %v1237, %v2111
        %v2114 = vunpack.c.l.s4 1985246804
        %v2115 = vunpack.c.0.s8 %v2114
        %v2116 = vlaneseq
        %v2117 = vshrl.u32 %v2116, 7
        %v2118 = vsub.s32 %v2115, %v2117
        %v2119 = vrot.slane %v1237, %v2118
        %v2121 = vunpack.c.l.s4 839922192
        %v2122 = vunpack.c.0.s8 %v2121
        %v2123 = vlaneseq
        %v2124 = vshrl.u32 %v2123, 7
        %v2125 = vsub.s32 %v2122, %v2124
        %v2126 = vrot.slane %v1238, %v2125
        %v2128 = vunpack.c.l.s4 1985246804
        %v2129 = vunpack.c.0.s8 %v2128
        %v2130 = vlaneseq
        %v2131 = vshrl.u32 %v2130, 7
        %v2132 = vsub.s32 %v2129, %v2131
        %v2133 = vrot.slane %v1238, %v2132
        %v2135 = vunpack.c.l.s4 839922192
        %v2136 = vunpack.c.0.s8 %v2135
        %v2137 = vlaneseq
        %v2138 = vshrl.u32 %v2137, 7
        %v2139 = vsub.s32 %v2136, %v2138
        %v2140 = vrot.slane %v1239, %v2139
        %v2142 = vunpack.c.l.s4 1985246804
        %v2143 = vunpack.c.0.s8 %v2142
        %v2144 = vlaneseq
        %v2145 = vshrl.u32 %v2144, 7
        %v2146 = vsub.s32 %v2143, %v2145
        %v2147 = vrot.slane %v1239, %v2146
        %v2149 = vunpack.c.l.s4 839922192
        %v2150 = vunpack.c.0.s8 %v2149
        %v2151 = vlaneseq
        %v2152 = vshrl.u32 %v2151, 7
        %v2153 = vsub.s32 %v2150, %v2152
        %v2154 = vrot.slane %v1240, %v2153
        %v2156 = vunpack.c.l.s4 1985246804
        %v2157 = vunpack.c.0.s8 %v2156
        %v2158 = vlaneseq
        %v2159 = vshrl.u32 %v2158, 7
        %v2160 = vsub.s32 %v2157, %v2159
        %v2161 = vrot.slane %v1240, %v2160
        %v2163 = vunpack.c.l.s4 839922192
        %v2164 = vunpack.c.0.s8 %v2163
        %v2165 = vlaneseq
        %v2166 = vshrl.u32 %v2165, 7
        %v2167 = vsub.s32 %v2164, %v2166
        %v2168 = vrot.slane %v1241, %v2167
        %v2170 = vunpack.c.l.s4 1985246804
        %v2171 = vunpack.c.0.s8 %v2170
        %v2172 = vlaneseq
        %v2173 = vshrl.u32 %v2172, 7
        %v2174 = vsub.s32 %v2171, %v2173
        %v2175 = vrot.slane %v1241, %v2174
        %v2177 = vunpack.c.l.s4 839922192
        %v2178 = vunpack.c.0.s8 %v2177
        %v2179 = vlaneseq
        %v2180 = vshrl.u32 %v2179, 7
        %v2181 = vsub.s32 %v2178, %v2180
        %v2182 = vrot.slane %v1242, %v2181
        %v2184 = vunpack.c.l.s4 1985246804
        %v2185 = vunpack.c.0.s8 %v2184
        %v2186 = vlaneseq
        %v2187 = vshrl.u32 %v2186, 7
        %v2188 = vsub.s32 %v2185, %v2187
        %v2189 = vrot.slane %v1242, %v2188
        %v2191 = vunpack.c.l.s4 839922192
        %v2192 = vunpack.c.0.s8 %v2191
        %v2193 = vlaneseq
        %v2194 = vshrl.u32 %v2193, 7
        %v2195 = vsub.s32 %v2192, %v2194
        %v2196 = vrot.slane %v1243, %v2195
        %v2198 = vunpack.c.l.s4 1985246804
        %v2199 = vunpack.c.0.s8 %v2198
        %v2200 = vlaneseq
        %v2201 = vshrl.u32 %v2200, 7
        %v2202 = vsub.s32 %v2199, %v2201
        %v2203 = vrot.slane %v1243, %v2202
        %v2332 = vmul.bf16 %v284, %v1314
        %v2333 = vmul.bf16 %v285, %v1321
        %v2334 = vmul.bf16 %v286, %v1328
        %v2335 = vmul.bf16 %v287, %v1335
        %v2336 = vmul.bf16 %v288, %v1342
        %v2337 = vmul.bf16 %v289, %v1349
        %v2338 = vmul.bf16 %v290, %v1356
        %v2339 = vmul.bf16 %v291, %v1363
        %v2340 = vmul.bf16 %v292, %v1370
        %v2341 = vmul.bf16 %v293, %v1377
        %v2342 = vmul.bf16 %v294, %v1384
        %v2343 = vmul.bf16 %v295, %v1391
        %v2344 = vmul.bf16 %v296, %v1398
        %v2345 = vmul.bf16 %v297, %v1405
        %v2346 = vmul.bf16 %v298, %v1412
        %v2347 = vmul.bf16 %v299, %v1419
        %v2348 = vmul.bf16 %v300, %v1426
        %v2349 = vmul.bf16 %v301, %v1433
        %v2350 = vmul.bf16 %v302, %v1440
        %v2351 = vmul.bf16 %v303, %v1447
        %v2352 = vmul.bf16 %v304, %v1454
        %v2353 = vmul.bf16 %v305, %v1461
        %v2354 = vmul.bf16 %v306, %v1468
        %v2355 = vmul.bf16 %v307, %v1475
        %v2356 = vmul.bf16 %v308, %v1482
        %v2357 = vmul.bf16 %v309, %v1489
        %v2358 = vmul.bf16 %v310, %v1496
        %v2359 = vmul.bf16 %v311, %v1503
        %v2360 = vmul.bf16 %v312, %v1510
        %v2361 = vmul.bf16 %v313, %v1517
        %v2362 = vmul.bf16 %v314, %v1524
        %v2363 = vmul.bf16 %v315, %v1531
        %v2364 = vmul.bf16 %v316, %v1538
        %v2365 = vmul.bf16 %v317, %v1545
        %v2366 = vmul.bf16 %v318, %v1552
        %v2367 = vmul.bf16 %v319, %v1559
        %v2368 = vmul.bf16 %v320, %v1566
        %v2369 = vmul.bf16 %v321, %v1573
        %v2370 = vmul.bf16 %v322, %v1580
        %v2371 = vmul.bf16 %v323, %v1587
        %v2372 = vmul.bf16 %v324, %v1594
        %v2373 = vmul.bf16 %v325, %v1601
        %v2374 = vmul.bf16 %v326, %v1608
        %v2375 = vmul.bf16 %v327, %v1615
        %v2376 = vmul.bf16 %v328, %v1622
        %v2377 = vmul.bf16 %v329, %v1629
        %v2378 = vmul.bf16 %v330, %v1636
        %v2379 = vmul.bf16 %v331, %v1643
        %v2380 = vmul.bf16 %v332, %v1650
        %v2381 = vmul.bf16 %v333, %v1657
        %v2382 = vmul.bf16 %v334, %v1664
        %v2383 = vmul.bf16 %v335, %v1671
        %v2384 = vmul.bf16 %v336, %v1678
        %v2385 = vmul.bf16 %v337, %v1685
        %v2386 = vmul.bf16 %v338, %v1692
        %v2387 = vmul.bf16 %v339, %v1699
        %v2388 = vmul.bf16 %v340, %v1706
        %v2389 = vmul.bf16 %v341, %v1713
        %v2390 = vmul.bf16 %v342, %v1720
        %v2391 = vmul.bf16 %v343, %v1727
        %v2392 = vmul.bf16 %v344, %v1734
        %v2393 = vmul.bf16 %v345, %v1741
        %v2394 = vmul.bf16 %v346, %v1748
        %v2395 = vmul.bf16 %v347, %v1755
        %v2396 = vmul.bf16 %v348, %v1762
        %v2397 = vmul.bf16 %v349, %v1769
        %v2398 = vmul.bf16 %v350, %v1776
        %v2399 = vmul.bf16 %v351, %v1783
        %v2400 = vmul.bf16 %v352, %v1790
        %v2401 = vmul.bf16 %v353, %v1797
        %v2402 = vmul.bf16 %v354, %v1804
        %v2403 = vmul.bf16 %v355, %v1811
        %v2404 = vmul.bf16 %v356, %v1818
        %v2405 = vmul.bf16 %v357, %v1825
        %v2406 = vmul.bf16 %v358, %v1832
        %v2407 = vmul.bf16 %v359, %v1839
        %v2408 = vmul.bf16 %v360, %v1846
        %v2409 = vmul.bf16 %v361, %v1853
        %v2410 = vmul.bf16 %v362, %v1860
        %v2411 = vmul.bf16 %v363, %v1867
        %v2412 = vmul.bf16 %v364, %v1874
        %v2413 = vmul.bf16 %v365, %v1881
        %v2414 = vmul.bf16 %v366, %v1888
        %v2415 = vmul.bf16 %v367, %v1895
        %v2416 = vmul.bf16 %v368, %v1902
        %v2417 = vmul.bf16 %v369, %v1909
        %v2418 = vmul.bf16 %v370, %v1916
        %v2419 = vmul.bf16 %v371, %v1923
        %v2420 = vmul.bf16 %v372, %v1930
        %v2421 = vmul.bf16 %v373, %v1937
        %v2422 = vmul.bf16 %v374, %v1944
        %v2423 = vmul.bf16 %v375, %v1951
        %v2424 = vmul.bf16 %v376, %v1958
        %v2425 = vmul.bf16 %v377, %v1965
        %v2426 = vmul.bf16 %v378, %v1972
        %v2427 = vmul.bf16 %v379, %v1979
        %v2428 = vmul.bf16 %v380, %v1986
        %v2429 = vmul.bf16 %v381, %v1993
        %v2430 = vmul.bf16 %v382, %v2000
        %v2431 = vmul.bf16 %v383, %v2007
        %v2432 = vmul.bf16 %v384, %v2014
        %v2433 = vmul.bf16 %v385, %v2021
        %v2434 = vmul.bf16 %v386, %v2028
        %v2435 = vmul.bf16 %v387, %v2035
        %v2436 = vmul.bf16 %v388, %v2042
        %v2437 = vmul.bf16 %v389, %v2049
        %v2438 = vmul.bf16 %v390, %v2056
        %v2439 = vmul.bf16 %v391, %v2063
        %v2440 = vmul.bf16 %v392, %v2070
        %v2441 = vmul.bf16 %v393, %v2077
        %v2442 = vmul.bf16 %v394, %v2084
        %v2443 = vmul.bf16 %v395, %v2091
        %v2444 = vmul.bf16 %v396, %v2098
        %v2445 = vmul.bf16 %v397, %v2105
        %v2446 = vmul.bf16 %v398, %v2112
        %v2447 = vmul.bf16 %v399, %v2119
        %v2448 = vmul.bf16 %v400, %v2126
        %v2449 = vmul.bf16 %v401, %v2133
        %v2450 = vmul.bf16 %v402, %v2140
        %v2451 = vmul.bf16 %v403, %v2147
        %v2452 = vmul.bf16 %v404, %v2154
        %v2453 = vmul.bf16 %v405, %v2161
        %v2454 = vmul.bf16 %v406, %v2168
        %v2455 = vmul.bf16 %v407, %v2175
        %v2456 = vmul.bf16 %v408, %v2182
        %v2457 = vmul.bf16 %v409, %v2189
        %v2458 = vmul.bf16 %v410, %v2196
        %v2459 = vmul.bf16 %v411, %v2203
        %v2460 = vld [vmem:[%s272] sm:$0xf]
        %v2589 = vunpack.c.l.b16 %v2332
        %v2590 = vunpack.c.l.b16 %v2333
        %v2591 = vunpack.c.l.b16 %v2334
        %v2592 = vunpack.c.l.b16 %v2335
        %v2593 = vunpack.c.l.b16 %v2336
        %v2594 = vunpack.c.l.b16 %v2337
        %v2595 = vunpack.c.l.b16 %v2338
        %v2596 = vunpack.c.l.b16 %v2339
        %v2597 = vunpack.c.l.b16 %v2340
        %v2598 = vunpack.c.l.b16 %v2341
        %v2599 = vunpack.c.l.b16 %v2342
        %v2600 = vunpack.c.l.b16 %v2343
        %v2601 = vunpack.c.l.b16 %v2344
        %v2602 = vunpack.c.l.b16 %v2345
        %v2603 = vunpack.c.l.b16 %v2346
        %v2604 = vunpack.c.l.b16 %v2347
        %v2605 = vunpack.c.l.b16 %v2348
        %v2606 = vunpack.c.l.b16 %v2349
        %v2607 = vunpack.c.l.b16 %v2350
        %v2608 = vunpack.c.l.b16 %v2351
        %v2609 = vunpack.c.l.b16 %v2352
        %v2610 = vunpack.c.l.b16 %v2353
        %v2611 = vunpack.c.l.b16 %v2354
        %v2612 = vunpack.c.l.b16 %v2355
        %v2613 = vunpack.c.l.b16 %v2356
        %v2614 = vunpack.c.l.b16 %v2357
        %v2615 = vunpack.c.l.b16 %v2358
        %v2616 = vunpack.c.l.b16 %v2359
        %v2617 = vunpack.c.l.b16 %v2360
        %v2618 = vunpack.c.l.b16 %v2361
        %v2619 = vunpack.c.l.b16 %v2362
        %v2620 = vunpack.c.l.b16 %v2363
        %v2621 = vunpack.c.l.b16 %v2364
        %v2622 = vunpack.c.l.b16 %v2365
        %v2623 = vunpack.c.l.b16 %v2366
        %v2624 = vunpack.c.l.b16 %v2367
        %v2625 = vunpack.c.l.b16 %v2368
        %v2626 = vunpack.c.l.b16 %v2369
        %v2627 = vunpack.c.l.b16 %v2370
        %v2628 = vunpack.c.l.b16 %v2371
        %v2629 = vunpack.c.l.b16 %v2372
        %v2630 = vunpack.c.l.b16 %v2373
        %v2631 = vunpack.c.l.b16 %v2374
        %v2632 = vunpack.c.l.b16 %v2375
        %v2633 = vunpack.c.l.b16 %v2376
        %v2634 = vunpack.c.l.b16 %v2377
        %v2635 = vunpack.c.l.b16 %v2378
        %v2636 = vunpack.c.l.b16 %v2379
        %v2637 = vunpack.c.l.b16 %v2380
        %v2638 = vunpack.c.l.b16 %v2381
        %v2639 = vunpack.c.l.b16 %v2382
        %v2640 = vunpack.c.l.b16 %v2383
        %v2641 = vunpack.c.l.b16 %v2384
        %v2642 = vunpack.c.l.b16 %v2385
        %v2643 = vunpack.c.l.b16 %v2386
        %v2644 = vunpack.c.l.b16 %v2387
        %v2645 = vunpack.c.l.b16 %v2388
        %v2646 = vunpack.c.l.b16 %v2389
        %v2647 = vunpack.c.l.b16 %v2390
        %v2648 = vunpack.c.l.b16 %v2391
        %v2649 = vunpack.c.l.b16 %v2392
        %v2650 = vunpack.c.l.b16 %v2393
        %v2651 = vunpack.c.l.b16 %v2394
        %v2652 = vunpack.c.l.b16 %v2395
        %v2653 = vunpack.c.l.b16 %v2396
        %v2654 = vunpack.c.l.b16 %v2397
        %v2655 = vunpack.c.l.b16 %v2398
        %v2656 = vunpack.c.l.b16 %v2399
        %v2657 = vunpack.c.l.b16 %v2400
        %v2658 = vunpack.c.l.b16 %v2401
        %v2659 = vunpack.c.l.b16 %v2402
        %v2660 = vunpack.c.l.b16 %v2403
        %v2661 = vunpack.c.l.b16 %v2404
        %v2662 = vunpack.c.l.b16 %v2405
        %v2663 = vunpack.c.l.b16 %v2406
        %v2664 = vunpack.c.l.b16 %v2407
        %v2665 = vunpack.c.l.b16 %v2408
        %v2666 = vunpack.c.l.b16 %v2409
        %v2667 = vunpack.c.l.b16 %v2410
        %v2668 = vunpack.c.l.b16 %v2411
        %v2669 = vunpack.c.l.b16 %v2412
        %v2670 = vunpack.c.l.b16 %v2413
        %v2671 = vunpack.c.l.b16 %v2414
        %v2672 = vunpack.c.l.b16 %v2415
        %v2673 = vunpack.c.l.b16 %v2416
        %v2674 = vunpack.c.l.b16 %v2417
        %v2675 = vunpack.c.l.b16 %v2418
        %v2676 = vunpack.c.l.b16 %v2419
        %v2677 = vunpack.c.l.b16 %v2420
        %v2678 = vunpack.c.l.b16 %v2421
        %v2679 = vunpack.c.l.b16 %v2422
        %v2680 = vunpack.c.l.b16 %v2423
        %v2681 = vunpack.c.l.b16 %v2424
        %v2682 = vunpack.c.l.b16 %v2425
        %v2683 = vunpack.c.l.b16 %v2426
        %v2684 = vunpack.c.l.b16 %v2427
        %v2685 = vunpack.c.l.b16 %v2428
        %v2686 = vunpack.c.l.b16 %v2429
        %v2687 = vunpack.c.l.b16 %v2430
        %v2688 = vunpack.c.l.b16 %v2431
        %v2689 = vunpack.c.l.b16 %v2432
        %v2690 = vunpack.c.l.b16 %v2433
        %v2691 = vunpack.c.l.b16 %v2434
        %v2692 = vunpack.c.l.b16 %v2435
        %v2693 = vunpack.c.l.b16 %v2436
        %v2694 = vunpack.c.l.b16 %v2437
        %v2695 = vunpack.c.l.b16 %v2438
        %v2696 = vunpack.c.l.b16 %v2439
        %v2697 = vunpack.c.l.b16 %v2440
        %v2698 = vunpack.c.l.b16 %v2441
        %v2699 = vunpack.c.l.b16 %v2442
        %v2700 = vunpack.c.l.b16 %v2443
        %v2701 = vunpack.c.l.b16 %v2444
        %v2702 = vunpack.c.l.b16 %v2445
        %v2703 = vunpack.c.l.b16 %v2446
        %v2704 = vunpack.c.l.b16 %v2447
        %v2705 = vunpack.c.l.b16 %v2448
        %v2706 = vunpack.c.l.b16 %v2449
        %v2707 = vunpack.c.l.b16 %v2450
        %v2708 = vunpack.c.l.b16 %v2451
        %v2709 = vunpack.c.l.b16 %v2452
        %v2710 = vunpack.c.l.b16 %v2453
        %v2711 = vunpack.c.l.b16 %v2454
        %v2712 = vunpack.c.l.b16 %v2455
        %v2713 = vunpack.c.l.b16 %v2456
        %v2714 = vunpack.c.l.b16 %v2457
        %v2715 = vunpack.c.l.b16 %v2458
        %v2716 = vunpack.c.l.b16 %v2459
        %v2717 = vpack.c.b16 %v2590, %v2589
        %v2718 = vpack.c.b16 %v2592, %v2591
        %v2719 = vpack.c.b16 %v2594, %v2593
        %v2720 = vpack.c.b16 %v2596, %v2595
        %v2721 = vpack.c.b16 %v2598, %v2597
        %v2722 = vpack.c.b16 %v2600, %v2599
        %v2723 = vpack.c.b16 %v2602, %v2601
        %v2724 = vpack.c.b16 %v2604, %v2603
        %v2725 = vpack.c.b16 %v2606, %v2605
        %v2726 = vpack.c.b16 %v2608, %v2607
        %v2727 = vpack.c.b16 %v2610, %v2609
        %v2728 = vpack.c.b16 %v2612, %v2611
        %v2729 = vpack.c.b16 %v2614, %v2613
        %v2730 = vpack.c.b16 %v2616, %v2615
        %v2731 = vpack.c.b16 %v2618, %v2617
        %v2732 = vpack.c.b16 %v2620, %v2619
        %v2733 = vpack.c.b16 %v2622, %v2621
        %v2734 = vpack.c.b16 %v2624, %v2623
        %v2735 = vpack.c.b16 %v2626, %v2625
        %v2736 = vpack.c.b16 %v2628, %v2627
        %v2737 = vpack.c.b16 %v2630, %v2629
        %v2738 = vpack.c.b16 %v2632, %v2631
        %v2739 = vpack.c.b16 %v2634, %v2633
        %v2740 = vpack.c.b16 %v2636, %v2635
        %v2741 = vpack.c.b16 %v2638, %v2637
        %v2742 = vpack.c.b16 %v2640, %v2639
        %v2743 = vpack.c.b16 %v2642, %v2641
        %v2744 = vpack.c.b16 %v2644, %v2643
        %v2745 = vpack.c.b16 %v2646, %v2645
        %v2746 = vpack.c.b16 %v2648, %v2647
        %v2747 = vpack.c.b16 %v2650, %v2649
        %v2748 = vpack.c.b16 %v2652, %v2651
        %v2749 = vpack.c.b16 %v2654, %v2653
        %v2750 = vpack.c.b16 %v2656, %v2655
        %v2751 = vpack.c.b16 %v2658, %v2657
        %v2752 = vpack.c.b16 %v2660, %v2659
        %v2753 = vpack.c.b16 %v2662, %v2661
        %v2754 = vpack.c.b16 %v2664, %v2663
        %v2755 = vpack.c.b16 %v2666, %v2665
        %v2756 = vpack.c.b16 %v2668, %v2667
        %v2757 = vpack.c.b16 %v2670, %v2669
        %v2758 = vpack.c.b16 %v2672, %v2671
        %v2759 = vpack.c.b16 %v2674, %v2673
        %v2760 = vpack.c.b16 %v2676, %v2675
        %v2761 = vpack.c.b16 %v2678, %v2677
        %v2762 = vpack.c.b16 %v2680, %v2679
        %v2763 = vpack.c.b16 %v2682, %v2681
        %v2764 = vpack.c.b16 %v2684, %v2683
        %v2765 = vpack.c.b16 %v2686, %v2685
        %v2766 = vpack.c.b16 %v2688, %v2687
        %v2767 = vpack.c.b16 %v2690, %v2689
        %v2768 = vpack.c.b16 %v2692, %v2691
        %v2769 = vpack.c.b16 %v2694, %v2693
        %v2770 = vpack.c.b16 %v2696, %v2695
        %v2771 = vpack.c.b16 %v2698, %v2697
        %v2772 = vpack.c.b16 %v2700, %v2699
        %v2773 = vpack.c.b16 %v2702, %v2701
        %v2774 = vpack.c.b16 %v2704, %v2703
        %v2775 = vpack.c.b16 %v2706, %v2705
        %v2776 = vpack.c.b16 %v2708, %v2707
        %v2777 = vpack.c.b16 %v2710, %v2709
        %v2778 = vpack.c.b16 %v2712, %v2711
        %v2779 = vpack.c.b16 %v2714, %v2713
        %v2780 = vpack.c.b16 %v2716, %v2715
        %2845 = vmatprep.subr.bf16.mxu0 0
        %2846 = vmatpush1.bf16.xpose.msra.mxu0 %v2717
        %2847 = vmatprep.subr.bf16.mxu0 0
        %2848 = vmatpush1.bf16.xpose.msra.mxu0 %v2718
        %2849 = vmatprep.subr.bf16.mxu0 0
        %2850 = vmatpush1.bf16.xpose.msra.mxu0 %v2719
        %2851 = vmatprep.subr.bf16.mxu0 0
        %2852 = vmatpush1.bf16.xpose.msra.mxu0 %v2720
        %2853 = vmatprep.subr.bf16.mxu0 0
        %2854 = vmatpush1.bf16.xpose.msra.mxu0 %v2721
        %2855 = vmatprep.subr.bf16.mxu0 0
        %2856 = vmatpush1.bf16.xpose.msra.mxu0 %v2722
        %2857 = vmatprep.subr.bf16.mxu0 0
        %2858 = vmatpush1.bf16.xpose.msra.mxu0 %v2723
        %2859 = vmatprep.subr.bf16.mxu0 0
        %2860 = vmatpush1.bf16.xpose.msra.mxu0 %v2724
        %2861 = vmatprep.subr.bf16.mxu0 0
        %2862 = vmatpush1.bf16.xpose.msra.mxu0 %v2725
        %2863 = vmatprep.subr.bf16.mxu0 0
        %2864 = vmatpush1.bf16.xpose.msra.mxu0 %v2726
        %2865 = vmatprep.subr.bf16.mxu0 0
        %2866 = vmatpush1.bf16.xpose.msra.mxu0 %v2727
        %2867 = vmatprep.subr.bf16.mxu0 0
        %2868 = vmatpush1.bf16.xpose.msra.mxu0 %v2728
        %2869 = vmatprep.subr.bf16.mxu0 0
        %2870 = vmatpush1.bf16.xpose.msra.mxu0 %v2729
        %2871 = vmatprep.subr.bf16.mxu0 0
        %2872 = vmatpush1.bf16.xpose.msra.mxu0 %v2730
        %2873 = vmatprep.subr.bf16.mxu0 0
        %2874 = vmatpush1.bf16.xpose.msra.mxu0 %v2731
        %2875 = vmatprep.subr.bf16.mxu0 0
        %2876 = vmatpush1.bf16.xpose.msra.mxu0 %v2732
        %2877 = vmatprep.mubr.bf16.mxu0 0
        %2878 = vmatmul.mubr.bf16.gmra.mrb[0].mxu0 %v2460
        %v2879 = vpop.f32.mrb[0].mxu0
        %v2880 = vadd.f32 0.0, %v2879
        %v2881 = vpop.f32.mrb[0].mxu0
        %v2882 = vadd.f32 0.0, %v2881
        %v2883 = vpop.f32.mrb[0].mxu0
        %v2884 = vpop.f32.mrb[0].mxu0
        %2885 = vdwg.mxu0
        %2886 = vmatprep.subr.bf16.mxu0 0
        %2887 = vmatpush1.bf16.xpose.msra.mxu0 %v2733
        %2888 = vmatprep.subr.bf16.mxu0 0
        %2889 = vmatpush1.bf16.xpose.msra.mxu0 %v2734
        %2890 = vmatprep.subr.bf16.mxu0 0
        %2891 = vmatpush1.bf16.xpose.msra.mxu0 %v2735
        %2892 = vmatprep.subr.bf16.mxu0 0
        %2893 = vmatpush1.bf16.xpose.msra.mxu0 %v2736
        %2894 = vmatprep.subr.bf16.mxu0 0
        %2895 = vmatpush1.bf16.xpose.msra.mxu0 %v2737
        %2896 = vmatprep.subr.bf16.mxu0 0
        %2897 = vmatpush1.bf16.xpose.msra.mxu0 %v2738
        %2898 = vmatprep.subr.bf16.mxu0 0
        %2899 = vmatpush1.bf16.xpose.msra.mxu0 %v2739
        %2900 = vmatprep.subr.bf16.mxu0 0
        %2901 = vmatpush1.bf16.xpose.msra.mxu0 %v2740
        %2902 = vmatprep.subr.bf16.mxu0 0
        %2903 = vmatpush1.bf16.xpose.msra.mxu0 %v2741
        %2904 = vmatprep.subr.bf16.mxu0 0
        %2905 = vmatpush1.bf16.xpose.msra.mxu0 %v2742
        %2906 = vmatprep.subr.bf16.mxu0 0
        %2907 = vmatpush1.bf16.xpose.msra.mxu0 %v2743
        %2908 = vmatprep.subr.bf16.mxu0 0
        %2909 = vmatpush1.bf16.xpose.msra.mxu0 %v2744
        %2910 = vmatprep.subr.bf16.mxu0 0
        %2911 = vmatpush1.bf16.xpose.msra.mxu0 %v2745
        %2912 = vmatprep.subr.bf16.mxu0 0
        %2913 = vmatpush1.bf16.xpose.msra.mxu0 %v2746
        %2914 = vmatprep.subr.bf16.mxu0 0
        %2915 = vmatpush1.bf16.xpose.msra.mxu0 %v2747
        %2916 = vmatprep.subr.bf16.mxu0 0
        %2917 = vmatpush1.bf16.xpose.msra.mxu0 %v2748
        %2918 = vmatprep.mubr.bf16.mxu0 0
        %2919 = vmatmul.mubr.bf16.gmra.mrb[0].mxu0 %v2460
        %v2920 = vpop.f32.mrb[0].mxu0
        %v2921 = vadd.f32 0.0, %v2920
        %v2922 = vpop.f32.mrb[0].mxu0
        %v2923 = vadd.f32 0.0, %v2922
        %v2924 = vpop.f32.mrb[0].mxu0
        %v2925 = vpop.f32.mrb[0].mxu0
        %2926 = vdwg.mxu0
        %2927 = vmatprep.subr.bf16.mxu0 0
        %2928 = vmatpush1.bf16.xpose.msra.mxu0 %v2749
        %2929 = vmatprep.subr.bf16.mxu0 0
        %2930 = vmatpush1.bf16.xpose.msra.mxu0 %v2750
        %2931 = vmatprep.subr.bf16.mxu0 0
        %2932 = vmatpush1.bf16.xpose.msra.mxu0 %v2751
        %2933 = vmatprep.subr.bf16.mxu0 0
        %2934 = vmatpush1.bf16.xpose.msra.mxu0 %v2752
        %2935 = vmatprep.subr.bf16.mxu0 0
        %2936 = vmatpush1.bf16.xpose.msra.mxu0 %v2753
        %2937 = vmatprep.subr.bf16.mxu0 0
        %2938 = vmatpush1.bf16.xpose.msra.mxu0 %v2754
        %2939 = vmatprep.subr.bf16.mxu0 0
        %2940 = vmatpush1.bf16.xpose.msra.mxu0 %v2755
        %2941 = vmatprep.subr.bf16.mxu0 0
        %2942 = vmatpush1.bf16.xpose.msra.mxu0 %v2756
        %2943 = vmatprep.subr.bf16.mxu0 0
        %2944 = vmatpush1.bf16.xpose.msra.mxu0 %v2757
        %2945 = vmatprep.subr.bf16.mxu0 0
        %2946 = vmatpush1.bf16.xpose.msra.mxu0 %v2758
        %2947 = vmatprep.subr.bf16.mxu0 0
        %2948 = vmatpush1.bf16.xpose.msra.mxu0 %v2759
        %2949 = vmatprep.subr.bf16.mxu0 0
        %2950 = vmatpush1.bf16.xpose.msra.mxu0 %v2760
        %2951 = vmatprep.subr.bf16.mxu0 0
        %2952 = vmatpush1.bf16.xpose.msra.mxu0 %v2761
        %2953 = vmatprep.subr.bf16.mxu0 0
        %2954 = vmatpush1.bf16.xpose.msra.mxu0 %v2762
        %2955 = vmatprep.subr.bf16.mxu0 0
        %2956 = vmatpush1.bf16.xpose.msra.mxu0 %v2763
        %2957 = vmatprep.subr.bf16.mxu0 0
        %2958 = vmatpush1.bf16.xpose.msra.mxu0 %v2764
        %2959 = vmatprep.mubr.bf16.mxu0 0
        %2960 = vmatmul.mubr.bf16.gmra.mrb[0].mxu0 %v2460
        %v2961 = vpop.f32.mrb[0].mxu0
        %v2962 = vadd.f32 0.0, %v2961
        %v2963 = vpop.f32.mrb[0].mxu0
        %v2964 = vadd.f32 0.0, %v2963
        %v2965 = vpop.f32.mrb[0].mxu0
        %v2966 = vpop.f32.mrb[0].mxu0
        %2967 = vdwg.mxu0
        %2968 = vmatprep.subr.bf16.mxu0 0
        %2969 = vmatpush1.bf16.xpose.msra.mxu0 %v2765
        %2970 = vmatprep.subr.bf16.mxu0 0
        %2971 = vmatpush1.bf16.xpose.msra.mxu0 %v2766
        %2972 = vmatprep.subr.bf16.mxu0 0
        %2973 = vmatpush1.bf16.xpose.msra.mxu0 %v2767
        %2974 = vmatprep.subr.bf16.mxu0 0
        %2975 = vmatpush1.bf16.xpose.msra.mxu0 %v2768
        %2976 = vmatprep.subr.bf16.mxu0 0
        %2977 = vmatpush1.bf16.xpose.msra.mxu0 %v2769
        %2978 = vmatprep.subr.bf16.mxu0 0
        %2979 = vmatpush1.bf16.xpose.msra.mxu0 %v2770
        %2980 = vmatprep.subr.bf16.mxu0 0
        %2981 = vmatpush1.bf16.xpose.msra.mxu0 %v2771
        %2982 = vmatprep.subr.bf16.mxu0 0
        %2983 = vmatpush1.bf16.xpose.msra.mxu0 %v2772
        %2984 = vmatprep.subr.bf16.mxu0 0
        %2985 = vmatpush1.bf16.xpose.msra.mxu0 %v2773
        %2986 = vmatprep.subr.bf16.mxu0 0
        %2987 = vmatpush1.bf16.xpose.msra.mxu0 %v2774
        %2988 = vmatprep.subr.bf16.mxu0 0
        %2989 = vmatpush1.bf16.xpose.msra.mxu0 %v2775
        %2990 = vmatprep.subr.bf16.mxu0 0
        %2991 = vmatpush1.bf16.xpose.msra.mxu0 %v2776
        %2992 = vmatprep.subr.bf16.mxu0 0
        %2993 = vmatpush1.bf16.xpose.msra.mxu0 %v2777
        %2994 = vmatprep.subr.bf16.mxu0 0
        %2995 = vmatpush1.bf16.xpose.msra.mxu0 %v2778
        %2996 = vmatprep.subr.bf16.mxu0 0
        %2997 = vmatpush1.bf16.xpose.msra.mxu0 %v2779
        %2998 = vmatprep.subr.bf16.mxu0 0
        %2999 = vmatpush1.bf16.xpose.msra.mxu0 %v2780
        %3000 = vmatprep.mubr.bf16.mxu0 0
        %3001 = vmatmul.mubr.bf16.gmra.mrb[0].mxu0 %v2460
        %v3002 = vpop.f32.mrb[0].mxu0
        %v3003 = vadd.f32 0.0, %v3002
        %v3004 = vpop.f32.mrb[0].mxu0
        %v3005 = vadd.f32 0.0, %v3004
        %v3006 = vpop.f32.mrb[0].mxu0
        %v3007 = vpop.f32.mrb[0].mxu0
        %3008 = vdwg.mxu0
        %v3009 = vld [vmem:[%s276] sm:$0xff]
        %v3010 = vsub.f32 %v3009, 0.5
        %3012 = vset.pattern.permute.xlu0 0
        %3013 = vperm.xlu0 %3012, %v3010
        %v3014 = vpop.permute.xlu0 %3013
        %vm3016 = vcmp.gt.f32.partialorder %v2880, %v3014
        %vm3017 = vcmp.gt.f32.partialorder %v2882, %v3014
        %vm3018 = vcmp.gt.f32.partialorder %v2921, %v3014
        %vm3019 = vcmp.gt.f32.partialorder %v2923, %v3014
        %vm3020 = vcmp.gt.f32.partialorder %v2962, %v3014
        %vm3021 = vcmp.gt.f32.partialorder %v2964, %v3014
        %vm3022 = vcmp.gt.f32.partialorder %v3003, %v3014
        %vm3023 = vcmp.gt.f32.partialorder %v3005, %v3014
        %v3024 = vmul.f32 %v2880, 1.2
        %v3025 = vmul.f32 %v2882, 1.2
        %v3026 = vmul.f32 %v2921, 1.2
        %v3027 = vmul.f32 %v2923, 1.2
        %v3028 = vmul.f32 %v2962, 1.2
        %v3029 = vmul.f32 %v2964, 1.2
        %v3030 = vmul.f32 %v3003, 1.2
        %v3031 = vmul.f32 %v3005, 1.2
        %v3032 = vadd.f32 %v3024, 0.2
        %v3033 = vadd.f32 %v3025, 0.2
        %v3034 = vadd.f32 %v3026, 0.2
        %v3035 = vadd.f32 %v3027, 0.2
        %v3036 = vadd.f32 %v3028, 0.2
        %v3037 = vadd.f32 %v3029, 0.2
        %v3038 = vadd.f32 %v3030, 0.2
        %v3039 = vadd.f32 %v3031, 0.2
        %v3040 = vsel %vm3016, %v3032, %v2880
        %v3041 = vsel %vm3017, %v3033, %v2882
        %v3042 = vsel %vm3018, %v3034, %v2921
        %v3043 = vsel %vm3019, %v3035, %v2923
        %v3044 = vsel %vm3020, %v3036, %v2962
        %v3045 = vsel %vm3021, %v3037, %v2964
        %v3046 = vsel %vm3022, %v3038, %v3003
        %v3047 = vsel %vm3023, %v3039, %v3005
        %v3048 = vlaneseq
        %v3049 = vand.u32 %v3048, 127
        %v3050 = vadd.s32 %v3049, 128
        %v3051 = vadd.s32 %v3049, 256
        %v3052 = vadd.s32 %v3049, 384
        %v3053 = vadd.s32 %v3049, 512
        %v3054 = vadd.s32 %v3049, 640
        %v3055 = vadd.s32 %v3049, 768
        %v3056 = vadd.s32 %v3049, 896
        %s3057 = smul.u32 %s26, 1024
        %v3058 = vstv %s3057
        %v3059 = vadd.s32 %v3049, %v3058
        %v3060 = vadd.s32 %v3050, %v3058
        %v3061 = vadd.s32 %v3051, %v3058
        %v3062 = vadd.s32 %v3052, %v3058
        %v3063 = vadd.s32 %v3053, %v3058
        %v3064 = vadd.s32 %v3054, %v3058
        %v3065 = vadd.s32 %v3055, %v3058
        %v3066 = vadd.s32 %v3056, %v3058
        %v3067 = vld [vmem:[%s280] sm:$0xff]
        %3068 = vset.pattern.permute.xlu0 0
        %3069 = vperm.xlu0 %3068, %v3067
        %v3070 = vpop.permute.xlu0 %3069
        %vm3071 = vcmp.eq.s32.totalorder %v3059, %v3070
        %vm3072 = vcmp.eq.s32.totalorder %v3060, %v3070
        %vm3073 = vcmp.eq.s32.totalorder %v3061, %v3070
        %vm3074 = vcmp.eq.s32.totalorder %v3062, %v3070
        %vm3075 = vcmp.eq.s32.totalorder %v3063, %v3070
        %vm3076 = vcmp.eq.s32.totalorder %v3064, %v3070
        %vm3077 = vcmp.eq.s32.totalorder %v3065, %v3070
        %vm3078 = vcmp.eq.s32.totalorder %v3066, %v3070
        %v3079 = vsel %vm3071, %v3014, %v3040
        %v3080 = vsel %vm3072, %v3014, %v3041
        %v3081 = vsel %vm3073, %v3014, %v3042
        %v3082 = vsel %vm3074, %v3014, %v3043
        %v3083 = vsel %vm3075, %v3014, %v3044
        %v3084 = vsel %vm3076, %v3014, %v3045
        %v3085 = vsel %vm3077, %v3014, %v3046
        %v3086 = vsel %vm3078, %v3014, %v3047
        %v3087 = vmul.f32 %v3079, 32.0
        %v3088 = vmul.f32 %v3080, 32.0
        %v3089 = vmul.f32 %v3081, 32.0
        %v3090 = vmul.f32 %v3082, 32.0
        %v3091 = vmul.f32 %v3083, 32.0
        %v3092 = vmul.f32 %v3084, 32.0
        %v3093 = vmul.f32 %v3085, 32.0
        %v3094 = vmul.f32 %v3086, 32.0
        %3095 = vst [vmem:[%s268] sm:$0xff] %v3087
        %3096 = vst [vmem:[%s268 + $0x8] sm:$0xff] %v3088
        %3097 = vst [vmem:[%s268 + $0x10] sm:$0xff] %v3089
        %3098 = vst [vmem:[%s268 + $0x18] sm:$0xff] %v3090
        %3099 = vst [vmem:[%s268 + $0x20] sm:$0xff] %v3091
        %3100 = vst [vmem:[%s268 + $0x28] sm:$0xff] %v3092
        %3101 = vst [vmem:[%s268 + $0x30] sm:$0xff] %v3093
        %3102 = vst [vmem:[%s268 + $0x38] sm:$0xff] %v3094
        %s3103 = sand.u32 %s147, 1
        %s3104 = scalar_lea.sflag [#allocation4], %s3103
        %s3105 = sand.u32 %s147, 1
        %s3106 = smul.addr %s3105, 64
        %s3107 = scalar_lea.vmem [#allocation5], %s3106
        // Predicated region
        $region41: #{fc_forward.1} parent=35 // pred_check
          %p3108 = pneg %p157
        $region42: #{fc_forward.1} parent=35 // pred_check_branch
          %3110 = sbr.rel (%p3108) target = $region44
        $region43: #{fc_forward.1} parent=35 // pred_region
          %s3111 = smul.u32 8, %s26
          %s3113 = ssub.s32 1024, 1024
          %3114 = vsyncadd %s3104, %s3113
          %s3115 = smul.addr %s25, 16
          %s3116 = sadd.s32 %s3111, %s3115
          %s3117 = smul.addr %s3116, 128
          %s3118 = scalar_lea.hbm %s4, %s3117
          %s3120 = sshll.u32 %s3107, 4
          %s3121 = int_to_ptr.vmem [resolvable:$true] %s3120
          %3123 = dma.vmem_to_hbm [thread:$0]  %s3121, 1024, %s3118, %s3104
        $region44: #{fc_forward.1} parent=35 // pred_fallthru
          _
      $region36: #{fc_forward.1} parent=5 // pred_fallthru
        _
      %p3124 = scmp.le.s32.totalorder 2, %s16
      // Predicated region
      $region45: #{fc_forward.1} parent=5 // pred_check
        %p3125 = pneg %p3124
      $region46: #{fc_forward.1} parent=5 // pred_check_branch
        %3127 = sbr.rel (%p3125) target = $region48
      $region47: #{fc_forward.1} parent=5 // pred_region
        %s3128 = ssub.s32 %s16, 2
        // Predicated region
        $region49: #{fc_forward.1} parent=47 // pred_check
          %p3129 = pneg %p163
        $region50: #{fc_forward.1} parent=47 // pred_check_branch
          %3131 = sbr.rel (%p3129) target = $region52
        $region51: #{fc_forward.1} parent=47 // pred_region
          %s3132 = sand.u32 %s148, 1
          %s3133 = scalar_lea.sflag [#allocation4], %s3132
          %s3134 = sand.u32 %s148, 1
          %s3135 = smul.addr %s3134, 64
          %s3136 = scalar_lea.vmem [#allocation5], %s3135
          %3137 = dma.done %s3133, 1024
        $region52: #{fc_forward.1} parent=47 // pred_fallthru
          _
      $region48: #{fc_forward.1} parent=5 // pred_fallthru
        _
    $region6: #{fc_forward.1} parent=1 // loop_footer
      %s20 = sadd.s32 1, %s16
    $region7: #{fc_forward.1} parent=1 // loop_footer_branch
      %15 = sbr.rel target = $region3
    $region8: #{fc_forward.1} parent=1 // loop_exit
      _
    %3138 = vsyncpa [#allocation3], 1
    %s3139 = scalar_lea.sflag [#allocation3], 1
    %3140 = vsyncpa %s3139, 1
    %3141 = vsyncpa [#allocation4], 1
    %s3142 = scalar_lea.sflag [#allocation4], 1
    %3143 = vsyncpa %s3142, 1

</llo_original>
